<compile_context>
chip_gen: v6e
topology: v6e:2x2x1
jax: 0.10.0
libtpu: 0.0.40
codegen_flags: <defaults>
</compile_context>

<pallas_src>
import functools

import jax
import jax.numpy as jnp
from jax.experimental import pallas as pl
from jax.experimental.pallas import tpu as pltpu

HIDDEN = 128
LANE = 128


def _round_up(x, m):
    return ((x + m - 1) // m) * m


def _sigmoid_one_eup(x):
    # sigmoid(x) == 0.5 * (tanh(0.5 * x) + 1): a single EUP push per vreg.
    return 0.5 * (jnp.tanh(0.5 * x) + 1.0)


def _bc_actor_kernel(x_ref, wih_ref, bg_ref, w1_ref, b1_ref, w2_ref, b2_ref,
                     out_ref):
    # x: (Bt, D); wih: (D, 3H) [i, g, o]; bg: (1, 3H); w1: (H, H); b1: (1, H);
    # w2: (H, A_pad); b2: (1, A_pad); out: (Bt, A_pad)
    h = HIDDEN
    x = x_ref[...]

    gates = jnp.dot(x, wih_ref[...], preferred_element_type=jnp.float32)
    gates = gates + bg_ref[...]                       # (1, 3H) broadcast

    i_g = _sigmoid_one_eup(gates[:, 0 * h:1 * h])
    g_g = jnp.tanh(gates[:, 1 * h:2 * h])
    o_g = _sigmoid_one_eup(gates[:, 2 * h:3 * h])

    h1 = o_g * jnp.tanh(i_g * g_g)                    # c1 = i*g (f*c0 == 0)

    z = jnp.dot(h1, w1_ref[...], preferred_element_type=jnp.float32) + b1_ref[...]
    z = jnp.maximum(z, 0.0)                           # ReLU

    y = jnp.dot(z, w2_ref[...], preferred_element_type=jnp.float32) + b2_ref[...]
    out_ref[...] = jnp.tanh(y)                        # padded lanes: tanh(0) = 0


@functools.partial(jax.jit, static_argnames=("action_dim", "block_b"))
def bc_actor_forward(states, kparams, *, action_dim, block_b=256):
    """states: (B, D) float32. Returns (B, action_dim) float32."""
    assert block_b % 8 == 0, "batch tile must be a multiple of 8 (sublane)"
    wih3, bg3, w1_t, b1, w2p, b2p = kparams

    b, d = states.shape
    three_h = wih3.shape[1]
    a_pad = w2p.shape[1]

    # Tile the batch: cap at block_b, but try to give the grid >= 2 steps so
    # both v7x TensorCores get work; pad the batch to a multiple of the tile.
    bb = min(block_b, _round_up(max(pl.cdiv(b, 2), 1), 8))
    b_pad = _round_up(b, bb)
    if b_pad != b:
        states = jnp.pad(states, ((0, b_pad - b), (0, 0)))

    grid = (b_pad // bb,)
    rep = lambda i: (0, 0)  # weights: constant block index -> fetched once

    out = pl.pallas_call(
        _bc_actor_kernel,
        out_shape=jax.ShapeDtypeStruct((b_pad, a_pad), jnp.float32),
        grid_spec=pltpu.PrefetchScalarGridSpec(
            num_scalar_prefetch=0,
            grid=grid,
            in_specs=[
                pl.BlockSpec((bb, d), lambda i: (i, 0)),      # states tile
                pl.BlockSpec((d, three_h), rep),              # W_ih^T (i,g,o)
                pl.BlockSpec((1, three_h), rep),              # b_ih + b_hh (i,g,o)
                pl.BlockSpec((HIDDEN, HIDDEN), rep),          # W1^T
                pl.BlockSpec((1, HIDDEN), rep),               # b1
                pl.BlockSpec((HIDDEN, a_pad), rep),           # W2^T (lane-padded)
                pl.BlockSpec((1, a_pad), rep),                # b2 (lane-padded)
            ],
            out_specs=pl.BlockSpec((bb, a_pad), lambda i: (i, 0)),
        ),
        compiler_params=pltpu.CompilerParams(
            dimension_semantics=("parallel",)),
    )(states, wih3, bg3, w1_t, b1, w2p, b2p)

    return out[:b, :action_dim]


def init_params(key, state_dim, action_dim):
    """Raw PyTorch-layout parameters with default-style uniform init."""
    ks = jax.random.split(key, 8)
    h = HIDDEN

    def unif(k, shape, fan_in):
        bound = 1.0 / jnp.sqrt(jnp.float32(fan_in))
        return jax.random.uniform(k, shape, jnp.float32, -bound, bound)

    w_ih = unif(ks[0], (4 * h, state_dim), h)   # LSTM W_ih, gate order i,f,g,o
    b_ih = unif(ks[1], (4 * h,), h)
    b_hh = unif(ks[2], (4 * h,), h)
    # W_hh never contributes (h0 == 0), so it is not materialized.
    w1 = unif(ks[3], (h, h), h)                 # Linear(128,128)
    b1 = unif(ks[4], (h,), h)
    w2 = unif(ks[5], (action_dim, h), h)        # Linear(128,A)
    b2 = unif(ks[6], (action_dim,), h)
    return (w_ih, b_ih, b_hh, w1, b1, w2, b2)


def prepare_kernel_params(raw):
    """Pre-transpose, drop the dead forget gate, fold biases, lane-pad output."""
    w_ih, b_ih, b_hh, w1, b1, w2, b2 = raw
    h = HIDDEN
    a = w2.shape[0]

    # Keep only i, g, o gate rows (forget gate multiplies c0 == 0).
    keep_w = jnp.concatenate(
        [w_ih[0 * h:1 * h], w_ih[2 * h:3 * h], w_ih[3 * h:4 * h]], axis=0)  # (3H, D)
    bsum = b_ih + b_hh
    keep_b = jnp.concatenate(
        [bsum[0 * h:1 * h], bsum[2 * h:3 * h], bsum[3 * h:4 * h]])          # (3H,)

    # Zero-pad the output projection to a full 128-lane slab for unmasked stores.
    a_pad = max(LANE, _round_up(a, LANE))
    w2p = jnp.zeros((h, a_pad), jnp.float32).at[:, :a].set(w2.T)
    b2p = jnp.zeros((1, a_pad), jnp.float32).at[0, :a].set(b2)

    return (
        jnp.asarray(keep_w.T),        # (D, 3H)
        keep_b.reshape(1, 3 * h),     # (1, 3H)
        jnp.asarray(w1.T),            # (H, H)
        b1.reshape(1, h),             # (1, H)
        w2p,                          # (H, A_pad)
        b2p,                          # (1, A_pad)
    )


def reference_forward(states, raw):
    """Pure-JAX reference mirroring the full PyTorch math (incl. forget gate)."""
    w_ih, b_ih, b_hh, w1, b1, w2, b2 = raw
    h = HIDDEN
    gates = states @ w_ih.T + b_ih + b_hh
    i_g = jax.nn.sigmoid(gates[:, 0 * h:1 * h])
    f_g = jax.nn.sigmoid(gates[:, 1 * h:2 * h])
    g_g = jnp.tanh(gates[:, 2 * h:3 * h])
    o_g = jax.nn.sigmoid(gates[:, 3 * h:4 * h])
    c1 = f_g * 0.0 + i_g * g_g
    h1 = o_g * jnp.tanh(c1)
    z = jnp.maximum(h1 @ w1.T + b1, 0.0)
    return jnp.tanh(z @ w2.T + b2)


if __name__ == "__main__":
    key = jax.random.PRNGKey(0)
    k_param, k_state = jax.random.split(key)

    batch = 512          # gives a 2-step "parallel" grid at block_b=256
    state_dim = 16       # state_shape = (16,)
    action_dim = 8       # action_shape = (8,)

    raw = init_params(k_param, state_dim, action_dim)
    kparams = prepare_kernel_params(raw)
    states = jax.random.normal(k_state, (batch, state_dim), jnp.float32)

    out = bc_actor_forward(states, kparams, action_dim=action_dim, block_b=256)
    out = jax.block_until_ready(out)

    ref = reference_forward(states, raw)
    assert out.shape == (batch, action_dim)
    assert jnp.allclose(out, ref, atol=1e-5, rtol=1e-5), "mismatch vs reference"

    # Also exercise a batch that is not a multiple of the tile (padding path).
    small = states[:12]
    out_small = jax.block_until_ready(
        bc_actor_forward(small, kparams, action_dim=action_dim, block_b=256))
    assert jnp.allclose(out_small, ref[:12], atol=1e-5, rtol=1e-5)

    # TODO(synk): sample()/evaluate_log_pi() depend on external reparameterize
    # helpers and log_stds (unused by forward); only forward() is implemented.
    print("KERNEL_OK")
</pallas_src>

<mosaic_0001>
module attributes {stable_mosaic.version = 11 : i64} {
  func.func @_bc_actor_kernel(%arg0: i32, %arg1: memref<256x16xf32, #tpu.memory_space<vmem>>, %arg2: memref<16x384xf32, #tpu.memory_space<vmem>>, %arg3: memref<1x384xf32, #tpu.memory_space<vmem>>, %arg4: memref<128x128xf32, #tpu.memory_space<vmem>>, %arg5: memref<1x128xf32, #tpu.memory_space<vmem>>, %arg6: memref<128x128xf32, #tpu.memory_space<vmem>>, %arg7: memref<1x128xf32, #tpu.memory_space<vmem>>, %arg8: memref<256x128xf32, #tpu.memory_space<vmem>>) attributes {dimension_semantics = [#tpu.dimension_semantics<parallel>], iteration_bounds = array<i64: 2>, scalar_prefetch = 0 : i64, scratch_operands = 0 : i64, tpu.core_type = #tpu.core_type<tc>, window_params = [{transform_indices = @transform_0, window_bounds = array<i64: 256, 16>}, {pipeline_mode = #tpu.pipeline_mode<synchronous>, transform_indices = @transform_1, window_bounds = array<i64: 16, 384>}, {pipeline_mode = #tpu.pipeline_mode<synchronous>, transform_indices = @transform_2, window_bounds = array<i64: 1, 384>}, {pipeline_mode = #tpu.pipeline_mode<synchronous>, transform_indices = @transform_3, window_bounds = array<i64: 128, 128>}, {pipeline_mode = #tpu.pipeline_mode<synchronous>, transform_indices = @transform_4, window_bounds = array<i64: 1, 128>}, {pipeline_mode = #tpu.pipeline_mode<synchronous>, transform_indices = @transform_5, window_bounds = array<i64: 128, 128>}, {pipeline_mode = #tpu.pipeline_mode<synchronous>, transform_indices = @transform_6, window_bounds = array<i64: 1, 128>}, {transform_indices = @transform_7, window_bounds = array<i64: 256, 128>}]} {
    %c0 = arith.constant 0 : index
    %c0_0 = arith.constant 0 : index
    %0 = vector.load %arg1[%c0, %c0_0] : memref<256x16xf32, #tpu.memory_space<vmem>>, vector<256x16xf32>
    %c0_1 = arith.constant 0 : index
    %c0_2 = arith.constant 0 : index
    %1 = vector.load %arg2[%c0_1, %c0_2] : memref<16x384xf32, #tpu.memory_space<vmem>>, vector<16x384xf32>
    %cst = arith.constant dense<0.000000e+00> : vector<256x384xf32>
    %2 = tpu.matmul %0, %1, %cst {dimension_numbers = #tpu.dot_dimension_numbers<[1], [0], [0], [1], [0, 0, 1, 1], [], []>} : vector<256x16xf32>, vector<16x384xf32>, vector<256x384xf32> -> vector<256x384xf32>
    %c0_3 = arith.constant 0 : index
    %c0_4 = arith.constant 0 : index
    %3 = vector.load %arg3[%c0_3, %c0_4] : memref<1x384xf32, #tpu.memory_space<vmem>>, vector<1x384xf32>
    %4 = vector.broadcast %3 : vector<1x384xf32> to vector<256x384xf32>
    %5 = arith.addf %2, %4 : vector<256x384xf32>
    %6 = vector.extract_strided_slice %5 {offsets = [0, 0], sizes = [256, 128], strides = [1, 1]} : vector<256x384xf32> to vector<256x128xf32>
    %cst_5 = arith.constant 5.000000e-01 : f32
    %7 = vector.broadcast %cst_5 : f32 to vector<256x128xf32>
    %8 = arith.mulf %7, %6 : vector<256x128xf32>
    %9 = math.tanh %8 : vector<256x128xf32>
    %cst_6 = arith.constant 1.000000e+00 : f32
    %10 = vector.broadcast %cst_6 : f32 to vector<256x128xf32>
    %11 = arith.addf %9, %10 : vector<256x128xf32>
    %cst_7 = arith.constant 5.000000e-01 : f32
    %12 = vector.broadcast %cst_7 : f32 to vector<256x128xf32>
    %13 = arith.mulf %12, %11 : vector<256x128xf32>
    %14 = vector.extract_strided_slice %5 {offsets = [0, 128], sizes = [256, 128], strides = [1, 1]} : vector<256x384xf32> to vector<256x128xf32>
    %15 = math.tanh %14 : vector<256x128xf32>
    %16 = vector.extract_strided_slice %5 {offsets = [0, 256], sizes = [256, 128], strides = [1, 1]} : vector<256x384xf32> to vector<256x128xf32>
    %cst_8 = arith.constant 5.000000e-01 : f32
    %17 = vector.broadcast %cst_8 : f32 to vector<256x128xf32>
    %18 = arith.mulf %17, %16 : vector<256x128xf32>
    %19 = math.tanh %18 : vector<256x128xf32>
    %cst_9 = arith.constant 1.000000e+00 : f32
    %20 = vector.broadcast %cst_9 : f32 to vector<256x128xf32>
    %21 = arith.addf %19, %20 : vector<256x128xf32>
    %cst_10 = arith.constant 5.000000e-01 : f32
    %22 = vector.broadcast %cst_10 : f32 to vector<256x128xf32>
    %23 = arith.mulf %22, %21 : vector<256x128xf32>
    %24 = arith.mulf %13, %15 : vector<256x128xf32>
    %25 = math.tanh %24 : vector<256x128xf32>
    %26 = arith.mulf %23, %25 : vector<256x128xf32>
    %c0_11 = arith.constant 0 : index
    %c0_12 = arith.constant 0 : index
    %27 = vector.load %arg4[%c0_11, %c0_12] : memref<128x128xf32, #tpu.memory_space<vmem>>, vector<128x128xf32>
    %cst_13 = arith.constant dense<0.000000e+00> : vector<256x128xf32>
    %28 = tpu.matmul %26, %27, %cst_13 {dimension_numbers = #tpu.dot_dimension_numbers<[1], [0], [0], [1], [0, 0, 1, 1], [], []>} : vector<256x128xf32>, vector<128x128xf32>, vector<256x128xf32> -> vector<256x128xf32>
    %c0_14 = arith.constant 0 : index
    %c0_15 = arith.constant 0 : index
    %29 = vector.load %arg5[%c0_14, %c0_15] : memref<1x128xf32, #tpu.memory_space<vmem>>, vector<1x128xf32>
    %30 = vector.broadcast %29 : vector<1x128xf32> to vector<256x128xf32>
    %31 = arith.addf %28, %30 : vector<256x128xf32>
    %cst_16 = arith.constant 0.000000e+00 : f32
    %32 = vector.broadcast %cst_16 : f32 to vector<256x128xf32>
    %33 = arith.maximumf %31, %32 : vector<256x128xf32>
    %c0_17 = arith.constant 0 : index
    %c0_18 = arith.constant 0 : index
    %34 = vector.load %arg6[%c0_17, %c0_18] : memref<128x128xf32, #tpu.memory_space<vmem>>, vector<128x128xf32>
    %cst_19 = arith.constant dense<0.000000e+00> : vector<256x128xf32>
    %35 = tpu.matmul %33, %34, %cst_19 {dimension_numbers = #tpu.dot_dimension_numbers<[1], [0], [0], [1], [0, 0, 1, 1], [], []>} : vector<256x128xf32>, vector<128x128xf32>, vector<256x128xf32> -> vector<256x128xf32>
    %c0_20 = arith.constant 0 : index
    %c0_21 = arith.constant 0 : index
    %36 = vector.load %arg7[%c0_20, %c0_21] : memref<1x128xf32, #tpu.memory_space<vmem>>, vector<1x128xf32>
    %37 = vector.broadcast %36 : vector<1x128xf32> to vector<256x128xf32>
    %38 = arith.addf %35, %37 : vector<256x128xf32>
    %39 = math.tanh %38 : vector<256x128xf32>
    %c0_22 = arith.constant 0 : index
    %c0_23 = arith.constant 0 : index
    %40 = vector.load %arg8[%c0_22, %c0_23] : memref<256x128xf32, #tpu.memory_space<vmem>>, vector<256x128xf32>
    tpu.vector_store %arg8[%c0_22, %c0_23], %39 {strides = array<i32>} : memref<256x128xf32, #tpu.memory_space<vmem>>, vector<256x128xf32>,
    return
  }
  func.func @transform_0(%arg0: i32) -> (i32, i32) {
    %c0_i32 = arith.constant 0 : i32
    %c0_i32_0 = arith.constant 0 : i32
    return %arg0, %c0_i32 : i32, i32
  }
  func.func @transform_1(%arg0: i32) -> (i32, i32) {
    %c0_i32 = arith.constant 0 : i32
    %c0_i32_0 = arith.constant 0 : i32
    %c0_i32_1 = arith.constant 0 : i32
    return %c0_i32, %c0_i32_0 : i32, i32
  }
  func.func @transform_2(%arg0: i32) -> (i32, i32) {
    %c0_i32 = arith.constant 0 : i32
    %c0_i32_0 = arith.constant 0 : i32
    %c0_i32_1 = arith.constant 0 : i32
    return %c0_i32, %c0_i32_0 : i32, i32
  }
  func.func @transform_3(%arg0: i32) -> (i32, i32) {
    %c0_i32 = arith.constant 0 : i32
    %c0_i32_0 = arith.constant 0 : i32
    %c0_i32_1 = arith.constant 0 : i32
    return %c0_i32, %c0_i32_0 : i32, i32
  }
  func.func @transform_4(%arg0: i32) -> (i32, i32) {
    %c0_i32 = arith.constant 0 : i32
    %c0_i32_0 = arith.constant 0 : i32
    %c0_i32_1 = arith.constant 0 : i32
    return %c0_i32, %c0_i32_0 : i32, i32
  }
  func.func @transform_5(%arg0: i32) -> (i32, i32) {
    %c0_i32 = arith.constant 0 : i32
    %c0_i32_0 = arith.constant 0 : i32
    %c0_i32_1 = arith.constant 0 : i32
    return %c0_i32, %c0_i32_0 : i32, i32
  }
  func.func @transform_6(%arg0: i32) -> (i32, i32) {
    %c0_i32 = arith.constant 0 : i32
    %c0_i32_0 = arith.constant 0 : i32
    %c0_i32_1 = arith.constant 0 : i32
    return %c0_i32, %c0_i32_0 : i32, i32
  }
  func.func @transform_7(%arg0: i32) -> (i32, i32) {
    %c0_i32 = arith.constant 0 : i32
    %c0_i32_0 = arith.constant 0 : i32
    return %arg0, %c0_i32 : i32, i32
  }
}

</mosaic_0001>

<llo_original>
// kernel: bc_actor_forward.1
$region0: #{bc_actor_forward.1}
  #allocation0 [shape = 'u32[]', space=smem, size = 0x4, offset = 0x4, fixed_abs, tag = 'smem constant byte address 0x4 - core index']
  #allocation1 [shape = 'u32[144,128]{1,0:T(1,128)}', space=vmem, size = 0x12000, scoped, tag = 'internal scratch']
  %s0 = inlined_call_operand.vmem [shape: f32[512,16], index: 0, kind: input, shape index: {}]
  %s1 = inlined_call_operand.vmem [shape: f32[16,384], index: 1, kind: input, shape index: {}]
  %s2 = inlined_call_operand.vmem [shape: f32[1,384], index: 2, kind: input, shape index: {}]
  %s3 = inlined_call_operand.vmem [shape: f32[128,128], index: 3, kind: input, shape index: {}]
  %s4 = inlined_call_operand.vmem [shape: f32[1,128], index: 4, kind: input, shape index: {}]
  %s5 = inlined_call_operand.vmem [shape: f32[128,128], index: 5, kind: input, shape index: {}]
  %s6 = inlined_call_operand.vmem [shape: f32[1,128], index: 6, kind: input, shape index: {}]
  %s7 = inlined_call_operand.vmem [shape: f32[512,128], index: 7, kind: output, shape index: {}]
  %s8 = sld [smem:[#allocation0]]
  $region61: #{bc_actor_forward.1} parent=0
    _
  %s10 = ssub.s32 1, %s8
  %s11 = scalar_select 0, %s10, %s8
  loop: start=0, step=1, limit=4
  $region2: #{bc_actor_forward.1} parent=0 // loop_pre_header
    _
  $region3: #{bc_actor_forward.1} parent=0 // loop_header
    %s13 = sphi 0, %s17
    %p14 = scmp.ge.s32.totalorder %s13, 4
    %s23 = sphi 0, %s25
    %s26 = sphi 0, %s23
    %s27 = sphi 0, %s26
    %s43 = sphi 0, %s27
    %s47 = sphi 0, %s47
    %s49 = sphi 0, %s47
    %s50 = sphi 0, %s49
    %s64 = sphi 0, %s50
    %s68 = sphi 0, %s68
    %s70 = sphi 0, %s68
    %s71 = sphi 0, %s70
    %s85 = sphi 0, %s71
    %s89 = sphi 0, %s89
    %s91 = sphi 0, %s89
    %s92 = sphi 0, %s91
    %s106 = sphi 0, %s92
    %s110 = sphi 0, %s110
    %s112 = sphi 0, %s110
    %s113 = sphi 0, %s112
    %s127 = sphi 0, %s113
    %s131 = sphi 0, %s131
    %s133 = sphi 0, %s131
    %s134 = sphi 0, %s133
    %s148 = sphi 0, %s134
    %s152 = sphi 0, %s152
    %s154 = sphi 0, %s152
    %s155 = sphi 0, %s154
    %s169 = sphi 0, %s155
    %s175 = sphi 0, %s177
    %s178 = sphi 0, %s175
    %s179 = sphi 0, %s178
    %s195 = sphi 0, %s179
  $region4: #{bc_actor_forward.1} parent=0 // loop_header_branch
    %16 = sbr.rel (%p14) target = $region8
  $region5: #{bc_actor_forward.1} parent=0 // loop_body
    %s18 = ssub.s32 %s13, 1
    %s19 = ssub.s32 %s13, 2
    %s20 = sadd.s32 %s13, 1
    %s21 = ssub.s32 %s13, %s20
    %p22 = scmp.eq.s32.totalorder %s21, 0
    %s24 = sadd.s32 %s23, 1
    %s25 = scalar_select %p22, %s23, %s24
    %p28 = pneg %p22
    %p29 = scmp.eq.s32.totalorder %s13, 1
    %p30 = por %p28, %p29
    %p31 = scmp.ne.s32.totalorder %s23, %s26
    %p32 = scmp.eq.s32.totalorder %s13, 0
    %p33 = por %p31, %p32
    %p34 = scmp.ne.s32.totalorder %s23, %s26
    %p35 = scmp.eq.s32.totalorder %s18, 1
    %p36 = por %p34, %p35
    %p37 = scmp.ne.s32.totalorder %s26, %s27
    %p38 = scmp.eq.s32.totalorder %s18, 0
    %p39 = por %p37, %p38
    %p40 = scmp.ne.s32.totalorder %s26, %s27
    %p41 = scmp.eq.s32.totalorder %s19, 1
    %p42 = por %p40, %p41
    %p44 = scmp.ne.s32.totalorder %s27, %s43
    %p45 = scmp.eq.s32.totalorder %s19, 0
    %p46 = por %p44, %p45
    %s48 = sadd.s32 %s47, 1
    %p51 = scmp.eq.s32.totalorder %s13, 1
    %p52 = scmp.ne.s32.totalorder %s47, %s49
    %p53 = scmp.eq.s32.totalorder %s13, 0
    %p54 = por %p52, %p53
    %p55 = scmp.ne.s32.totalorder %s47, %s49
    %p56 = scmp.eq.s32.totalorder %s18, 1
    %p57 = por %p55, %p56
    %p58 = scmp.ne.s32.totalorder %s49, %s50
    %p59 = scmp.eq.s32.totalorder %s18, 0
    %p60 = por %p58, %p59
    %p61 = scmp.ne.s32.totalorder %s49, %s50
    %p62 = scmp.eq.s32.totalorder %s19, 1
    %p63 = por %p61, %p62
    %p65 = scmp.ne.s32.totalorder %s50, %s64
    %p66 = scmp.eq.s32.totalorder %s19, 0
    %p67 = por %p65, %p66
    %s69 = sadd.s32 %s68, 1
    %p72 = scmp.eq.s32.totalorder %s13, 1
    %p73 = scmp.ne.s32.totalorder %s68, %s70
    %p74 = scmp.eq.s32.totalorder %s13, 0
    %p75 = por %p73, %p74
    %p76 = scmp.ne.s32.totalorder %s68, %s70
    %p77 = scmp.eq.s32.totalorder %s18, 1
    %p78 = por %p76, %p77
    %p79 = scmp.ne.s32.totalorder %s70, %s71
    %p80 = scmp.eq.s32.totalorder %s18, 0
    %p81 = por %p79, %p80
    %p82 = scmp.ne.s32.totalorder %s70, %s71
    %p83 = scmp.eq.s32.totalorder %s19, 1
    %p84 = por %p82, %p83
    %p86 = scmp.ne.s32.totalorder %s71, %s85
    %p87 = scmp.eq.s32.totalorder %s19, 0
    %p88 = por %p86, %p87
    %s90 = sadd.s32 %s89, 1
    %p93 = scmp.eq.s32.totalorder %s13, 1
    %p94 = scmp.ne.s32.totalorder %s89, %s91
    %p95 = scmp.eq.s32.totalorder %s13, 0
    %p96 = por %p94, %p95
    %p97 = scmp.ne.s32.totalorder %s89, %s91
    %p98 = scmp.eq.s32.totalorder %s18, 1
    %p99 = por %p97, %p98
    %p100 = scmp.ne.s32.totalorder %s91, %s92
    %p101 = scmp.eq.s32.totalorder %s18, 0
    %p102 = por %p100, %p101
    %p103 = scmp.ne.s32.totalorder %s91, %s92
    %p104 = scmp.eq.s32.totalorder %s19, 1
    %p105 = por %p103, %p104
    %p107 = scmp.ne.s32.totalorder %s92, %s106
    %p108 = scmp.eq.s32.totalorder %s19, 0
    %p109 = por %p107, %p108
    %s111 = sadd.s32 %s110, 1
    %p114 = scmp.eq.s32.totalorder %s13, 1
    %p115 = scmp.ne.s32.totalorder %s110, %s112
    %p116 = scmp.eq.s32.totalorder %s13, 0
    %p117 = por %p115, %p116
    %p118 = scmp.ne.s32.totalorder %s110, %s112
    %p119 = scmp.eq.s32.totalorder %s18, 1
    %p120 = por %p118, %p119
    %p121 = scmp.ne.s32.totalorder %s112, %s113
    %p122 = scmp.eq.s32.totalorder %s18, 0
    %p123 = por %p121, %p122
    %p124 = scmp.ne.s32.totalorder %s112, %s113
    %p125 = scmp.eq.s32.totalorder %s19, 1
    %p126 = por %p124, %p125
    %p128 = scmp.ne.s32.totalorder %s113, %s127
    %p129 = scmp.eq.s32.totalorder %s19, 0
    %p130 = por %p128, %p129
    %s132 = sadd.s32 %s131, 1
    %p135 = scmp.eq.s32.totalorder %s13, 1
    %p136 = scmp.ne.s32.totalorder %s131, %s133
    %p137 = scmp.eq.s32.totalorder %s13, 0
    %p138 = por %p136, %p137
    %p139 = scmp.ne.s32.totalorder %s131, %s133
    %p140 = scmp.eq.s32.totalorder %s18, 1
    %p141 = por %p139, %p140
    %p142 = scmp.ne.s32.totalorder %s133, %s134
    %p143 = scmp.eq.s32.totalorder %s18, 0
    %p144 = por %p142, %p143
    %p145 = scmp.ne.s32.totalorder %s133, %s134
    %p146 = scmp.eq.s32.totalorder %s19, 1
    %p147 = por %p145, %p146
    %p149 = scmp.ne.s32.totalorder %s134, %s148
    %p150 = scmp.eq.s32.totalorder %s19, 0
    %p151 = por %p149, %p150
    %s153 = sadd.s32 %s152, 1
    %p156 = scmp.eq.s32.totalorder %s13, 1
    %p157 = scmp.ne.s32.totalorder %s152, %s154
    %p158 = scmp.eq.s32.totalorder %s13, 0
    %p159 = por %p157, %p158
    %p160 = scmp.ne.s32.totalorder %s152, %s154
    %p161 = scmp.eq.s32.totalorder %s18, 1
    %p162 = por %p160, %p161
    %p163 = scmp.ne.s32.totalorder %s154, %s155
    %p164 = scmp.eq.s32.totalorder %s18, 0
    %p165 = por %p163, %p164
    %p166 = scmp.ne.s32.totalorder %s154, %s155
    %p167 = scmp.eq.s32.totalorder %s19, 1
    %p168 = por %p166, %p167
    %p170 = scmp.ne.s32.totalorder %s155, %s169
    %p171 = scmp.eq.s32.totalorder %s19, 0
    %p172 = por %p170, %p171
    %s173 = ssub.s32 %s13, %s20
    %p174 = scmp.eq.s32.totalorder %s173, 0
    %s176 = sadd.s32 %s175, 1
    %s177 = scalar_select %p174, %s175, %s176
    %p180 = pneg %p174
    %p181 = scmp.eq.s32.totalorder %s13, 1
    %p182 = por %p180, %p181
    %p183 = scmp.ne.s32.totalorder %s175, %s178
    %p184 = scmp.eq.s32.totalorder %s13, 0
    %p185 = por %p183, %p184
    %p186 = scmp.ne.s32.totalorder %s175, %s178
    %p187 = scmp.eq.s32.totalorder %s18, 1
    %p188 = por %p186, %p187
    %p189 = scmp.ne.s32.totalorder %s178, %s179
    %p190 = scmp.eq.s32.totalorder %s18, 0
    %p191 = por %p189, %p190
    %p192 = scmp.ne.s32.totalorder %s178, %s179
    %p193 = scmp.eq.s32.totalorder %s19, 1
    %p194 = por %p192, %p193
    %p196 = scmp.ne.s32.totalorder %s179, %s195
    %p197 = scmp.eq.s32.totalorder %s19, 0
    %p198 = por %p196, %p197
    %p199 = scmp.le.s32.totalorder 1, %s13
    %p200 = scmp.lt.s32.totalorder %s13, 3
    %p201 = pnand %p199, %p200
    %p202 = pneg %p201
    // Predicated region
    $region9: #{bc_actor_forward.1} parent=5 // pred_check
      _
    $region10: #{bc_actor_forward.1} parent=5 // pred_check_branch
      %204 = sbr.rel (%p201) target = $region12
    $region11: #{bc_actor_forward.1} parent=5 // pred_region
      %s205 = ssub.s32 %s13, 1
      // Predicated region
      $region13: #{bc_actor_forward.1} parent=11 // pred_check
        %p206 = pneg %p60
      $region14: #{bc_actor_forward.1} parent=11 // pred_check_branch
        %208 = sbr.rel (%p206) target = $region16
      $region15: #{bc_actor_forward.1} parent=11 // pred_region
        _
      $region16: #{bc_actor_forward.1} parent=11 // pred_fallthru
        _
      // Predicated region
      $region17: #{bc_actor_forward.1} parent=11 // pred_check
        %p209 = pneg %p81
      $region18: #{bc_actor_forward.1} parent=11 // pred_check_branch
        %211 = sbr.rel (%p209) target = $region20
      $region19: #{bc_actor_forward.1} parent=11 // pred_region
        _
      $region20: #{bc_actor_forward.1} parent=11 // pred_fallthru
        _
      // Predicated region
      $region21: #{bc_actor_forward.1} parent=11 // pred_check
        %p212 = pneg %p102
      $region22: #{bc_actor_forward.1} parent=11 // pred_check_branch
        %214 = sbr.rel (%p212) target = $region24
      $region23: #{bc_actor_forward.1} parent=11 // pred_region
        _
      $region24: #{bc_actor_forward.1} parent=11 // pred_fallthru
        _
      // Predicated region
      $region25: #{bc_actor_forward.1} parent=11 // pred_check
        %p215 = pneg %p123
      $region26: #{bc_actor_forward.1} parent=11 // pred_check_branch
        %217 = sbr.rel (%p215) target = $region28
      $region27: #{bc_actor_forward.1} parent=11 // pred_region
        _
      $region28: #{bc_actor_forward.1} parent=11 // pred_fallthru
        _
      // Predicated region
      $region29: #{bc_actor_forward.1} parent=11 // pred_check
        %p218 = pneg %p144
      $region30: #{bc_actor_forward.1} parent=11 // pred_check_branch
        %220 = sbr.rel (%p218) target = $region32
      $region31: #{bc_actor_forward.1} parent=11 // pred_region
        _
      $region32: #{bc_actor_forward.1} parent=11 // pred_fallthru
        _
      // Predicated region
      $region33: #{bc_actor_forward.1} parent=11 // pred_check
        %p221 = pneg %p165
      $region34: #{bc_actor_forward.1} parent=11 // pred_check_branch
        %223 = sbr.rel (%p221) target = $region36
      $region35: #{bc_actor_forward.1} parent=11 // pred_region
        _
      $region36: #{bc_actor_forward.1} parent=11 // pred_fallthru
        _
    $region12: #{bc_actor_forward.1} parent=5 // pred_fallthru
      _
    %p224 = scmp.lt.s32.totalorder %s13, 2
    // Predicated region
    $region37: #{bc_actor_forward.1} parent=5 // pred_check
      %p225 = pneg %p224
    $region38: #{bc_actor_forward.1} parent=5 // pred_check_branch
      %227 = sbr.rel (%p225) target = $region40
    $region39: #{bc_actor_forward.1} parent=5 // pred_region
      // Predicated region
      $region41: #{bc_actor_forward.1} parent=39 // pred_check
        %p228 = pneg %p33
      $region42: #{bc_actor_forward.1} parent=39 // pred_check_branch
        %230 = sbr.rel (%p228) target = $region44
      $region43: #{bc_actor_forward.1} parent=39 // pred_region
        %s231 = smul.u32 32, %s13
        %p232 = scmp.lt.s32.totalorder %s231, 63
        %s233 = scalar_select %p232, %s231, 63
        %s234 = smul.addr %s233, 8
        %s235 = scalar_lea.vmem %s0, %s234
        %s236 = smul.u32 32, %s13
      $region44: #{bc_actor_forward.1} parent=39 // pred_fallthru
        _
    $region40: #{bc_actor_forward.1} parent=5 // pred_fallthru
      _
    %p237 = scmp.le.s32.totalorder 1, %s13
    %p238 = scmp.lt.s32.totalorder %s13, 3
    %p239 = pnand %p237, %p238
    %p240 = pneg %p239
    // Predicated region
    $region45: #{bc_actor_forward.1} parent=5 // pred_check
      _
    $region46: #{bc_actor_forward.1} parent=5 // pred_check_branch
      %242 = sbr.rel (%p239) target = $region48
    $region47: #{bc_actor_forward.1} parent=5 // pred_region
      %s243 = ssub.s32 %s13, 1
      %s244 = smul.u32 32, %s18
      %p245 = scmp.lt.s32.totalorder %s244, 63
      %s246 = scalar_select %p245, %s244, 63
      %s247 = smul.addr %s246, 8
      %s248 = scalar_lea.vmem %s0, %s247
      %p249 = pneg %p39
      %p250 = pneg %p36
      %p251 = pneg %p60
      %p252 = pneg %p57
      %p253 = pneg %p81
      %p254 = pneg %p78
      %p255 = pneg %p102
      %p256 = pneg %p99
      %p257 = pneg %p123
      %p258 = pneg %p120
      %p259 = pneg %p144
      %p260 = pneg %p141
      %p261 = pneg %p165
      %p262 = pneg %p162
      %p263 = pneg %p191
      %p264 = pneg %p188
      %s265 = smul.u32 32, %s18
      %p266 = scmp.lt.s32.totalorder %s265, 63
      %s267 = scalar_select %p266, %s265, 63
      %s268 = smul.addr %s267, 8
      %s269 = scalar_lea.vmem %s7, %s268
      %s270 = smul.u32 32, %s18
      %p271 = scmp.lt.s32.totalorder %s270, 63
      %s272 = scalar_select %p271, %s270, 63
      %s273 = smul.addr %s272, 8
      %s274 = scalar_lea.vmem %s0, %s273
      %s275 = smul.u32 32, %s18
      %s276 = smul.u32 32, %s18
      %p277 = scmp.lt.s32.totalorder %s276, 63
      %s278 = scalar_select %p277, %s276, 63
      %s279 = smul.addr %s278, 8
      %s280 = scalar_lea.vmem %s7, %s279
      %s281 = smul.u32 32, %s18
      %v282 = vld [vmem:[%s274] sm:$0xff]
      %v283 = vld [vmem:[%s274 + $0x8] sm:$0xff]
      %v284 = vld [vmem:[%s274 + $0x10] sm:$0xff]
      %v285 = vld [vmem:[%s274 + $0x18] sm:$0xff]
      %v286 = vld [vmem:[%s274 + $0x20] sm:$0xff]
      %v287 = vld [vmem:[%s274 + $0x28] sm:$0xff]
      %v288 = vld [vmem:[%s274 + $0x30] sm:$0xff]
      %v289 = vld [vmem:[%s274 + $0x38] sm:$0xff]
      %v290 = vld [vmem:[%s274 + $0x40] sm:$0xff]
      %v291 = vld [vmem:[%s274 + $0x48] sm:$0xff]
      %v292 = vld [vmem:[%s274 + $0x50] sm:$0xff]
      %v293 = vld [vmem:[%s274 + $0x58] sm:$0xff]
      %v294 = vld [vmem:[%s274 + $0x60] sm:$0xff]
      %v295 = vld [vmem:[%s274 + $0x68] sm:$0xff]
      %v296 = vld [vmem:[%s274 + $0x70] sm:$0xff]
      %v297 = vld [vmem:[%s274 + $0x78] sm:$0xff]
      %v298 = vld [vmem:[%s274 + $0x80] sm:$0xff]
      %v299 = vld [vmem:[%s274 + $0x88] sm:$0xff]
      %v300 = vld [vmem:[%s274 + $0x90] sm:$0xff]
      %v301 = vld [vmem:[%s274 + $0x98] sm:$0xff]
      %v302 = vld [vmem:[%s274 + $0xa0] sm:$0xff]
      %v303 = vld [vmem:[%s274 + $0xa8] sm:$0xff]
      %v304 = vld [vmem:[%s274 + $0xb0] sm:$0xff]
      %v305 = vld [vmem:[%s274 + $0xb8] sm:$0xff]
      %v306 = vld [vmem:[%s274 + $0xc0] sm:$0xff]
      %v307 = vld [vmem:[%s274 + $0xc8] sm:$0xff]
      %v308 = vld [vmem:[%s274 + $0xd0] sm:$0xff]
      %v309 = vld [vmem:[%s274 + $0xd8] sm:$0xff]
      %v310 = vld [vmem:[%s274 + $0xe0] sm:$0xff]
      %v311 = vld [vmem:[%s274 + $0xe8] sm:$0xff]
      %v312 = vld [vmem:[%s274 + $0xf0] sm:$0xff]
      %v313 = vld [vmem:[%s274 + $0xf8] sm:$0xff]
      %v314 = vld [vmem:[%s1] sm:$0xff]
      %v315 = vld [vmem:[%s1 + $0x8] sm:$0xff]
      %v316 = vld [vmem:[%s1 + $0x10] sm:$0xff]
      %v317 = vld [vmem:[%s1 + $0x18] sm:$0xff]
      %v318 = vld [vmem:[%s1 + $0x20] sm:$0xff]
      %v319 = vld [vmem:[%s1 + $0x28] sm:$0xff]
      %v320 = vld [vmem:[%s2] sm:$0x7]
      %v322 = vlaneseq
      %v323 = vshrl.u32 %v322, 7
      %v324 = vsub.s32 0, %v323
      %v325 = vrot.slane %v320, %v324
      %v326 = vlaneseq
      %v327 = vshrl.u32 %v326, 7
      %v328 = vsub.s32 1, %v327
      %v329 = vrot.slane %v320, %v328
      %v330 = vlaneseq
      %v331 = vshrl.u32 %v330, 7
      %v332 = vsub.s32 2, %v331
      %v333 = vrot.slane %v320, %v332
      %vm337 = vcmask 130048
      %v339 = vsel %vm337, %v282, 0
      %v342 = vsel %vm337, %v283, 0
      %v345 = vsel %vm337, %v284, 0
      %v348 = vsel %vm337, %v285, 0
      %v351 = vsel %vm337, %v286, 0
      %v354 = vsel %vm337, %v287, 0
      %v357 = vsel %vm337, %v288, 0
      %v360 = vsel %vm337, %v289, 0
      %v363 = vsel %vm337, %v290, 0
      %v366 = vsel %vm337, %v291, 0
      %v369 = vsel %vm337, %v292, 0
      %v372 = vsel %vm337, %v293, 0
      %v375 = vsel %vm337, %v294, 0
      %v378 = vsel %vm337, %v295, 0
      %v381 = vsel %vm337, %v296, 0
      %v384 = vsel %vm337, %v297, 0
      %v387 = vsel %vm337, %v298, 0
      %v390 = vsel %vm337, %v299, 0
      %v393 = vsel %vm337, %v300, 0
      %v396 = vsel %vm337, %v301, 0
      %v399 = vsel %vm337, %v302, 0
      %v402 = vsel %vm337, %v303, 0
      %v405 = vsel %vm337, %v304, 0
      %v408 = vsel %vm337, %v305, 0
      %v411 = vsel %vm337, %v306, 0
      %v414 = vsel %vm337, %v307, 0
      %v417 = vsel %vm337, %v308, 0
      %v420 = vsel %vm337, %v309, 0
      %v423 = vsel %vm337, %v310, 0
      %v426 = vsel %vm337, %v311, 0
      %v429 = vsel %vm337, %v312, 0
      %v432 = vsel %vm337, %v313, 0
      %434 = vmatprep.subr.mxu0 0.0
      %435 = vmatpush1.msra.mxu0 0.0
      %436 = vmatprep.subr.mxu0 0.0
      %437 = vmatpush1.msra.mxu0 0.0
      %438 = vmatprep.subr.mxu0 0.0
      %439 = vmatpush1.msra.mxu0 0.0
      %440 = vmatprep.subr.mxu0 0.0
      %441 = vmatpush1.msra.mxu0 0.0
      %442 = vmatprep.subr.mxu0 0.0
      %443 = vmatpush1.msra.mxu0 0.0
      %444 = vmatprep.subr.mxu0 0.0
      %445 = vmatpush1.msra.mxu0 0.0
      %446 = vmatprep.subr.mxu0 0.0
      %447 = vmatpush1.msra.mxu0 0.0
      %448 = vmatprep.subr.mxu0 0.0
      %449 = vmatpush1.msra.mxu0 0.0
      %450 = vmatprep.subr.mxu0 0.0
      %451 = vmatpush1.msra.mxu0 0.0
      %452 = vmatprep.subr.mxu0 0.0
      %453 = vmatpush1.msra.mxu0 0.0
      %454 = vmatprep.subr.mxu0 0.0
      %455 = vmatpush1.msra.mxu0 0.0
      %456 = vmatprep.subr.mxu0 0.0
      %457 = vmatpush1.msra.mxu0 0.0
      %458 = vmatprep.subr.mxu0 0.0
      %459 = vmatpush1.msra.mxu0 0.0
      %460 = vmatprep.subr.mxu0 0.0
      %461 = vmatpush1.msra.mxu0 0.0
      %462 = vmatprep.subr.mxu0 %v318
      %463 = vmatpush1.msra.mxu0 %v317
      %464 = vmatprep.subr.mxu0 %v315
      %465 = vmatpush1.msra.mxu0 %v314
      %466 = vmatprep.subr.mxu0 0.0
      %467 = vmatpush2.msra.mxu0 0.0
      %468 = vmatprep.subr.mxu0 0.0
      %469 = vmatpush2.msra.mxu0 0.0
      %470 = vmatprep.subr.mxu0 0.0
      %471 = vmatpush2.msra.mxu0 0.0
      %472 = vmatprep.subr.mxu0 0.0
      %473 = vmatpush2.msra.mxu0 0.0
      %474 = vmatprep.subr.mxu0 0.0
      %475 = vmatpush2.msra.mxu0 0.0
      %476 = vmatprep.subr.mxu0 0.0
      %477 = vmatpush2.msra.mxu0 0.0
      %478 = vmatprep.subr.mxu0 0.0
      %479 = vmatpush2.msra.mxu0 0.0
      %480 = vmatprep.subr.mxu0 0.0
      %481 = vmatpush2.msra.mxu0 0.0
      %482 = vmatprep.subr.mxu0 0.0
      %483 = vmatpush2.msra.mxu0 0.0
      %484 = vmatprep.subr.mxu0 0.0
      %485 = vmatpush2.msra.mxu0 0.0
      %486 = vmatprep.subr.mxu0 0.0
      %487 = vmatpush2.msra.mxu0 0.0
      %488 = vmatprep.subr.mxu0 0.0
      %489 = vmatpush2.msra.mxu0 0.0
      %490 = vmatprep.subr.mxu0 0.0
      %491 = vmatpush2.msra.mxu0 0.0
      %492 = vmatprep.subr.mxu0 0.0
      %493 = vmatpush2.msra.mxu0 0.0
      %494 = vmatprep.subr.mxu0 0.0
      %495 = vmatpush2.msra.mxu0 0.0
      %496 = vmatprep.subr.mxu0 0.0
      %497 = vmatpush2.msra.mxu0 0.0
      %498 = vmatprep.mubr.f32.mxu0 0.0
      %499 = vmatmul.mubr.f32.gmra.mxu0 %v339
      %v500 = vpop.f32.mrf.mxu0
      %v501 = vadd.f32 %v325, %v500
      %v502 = vpop.f32.mrf.mxu0
      %v503 = vadd.f32 %v329, %v502
      %504 = vmatprep.mubr.f32.mxu0 0.0
      %505 = vmatmul.mubr.f32.gmra.mxu0 %v342
      %v506 = vpop.f32.mrf.mxu0
      %v507 = vadd.f32 %v325, %v506
      %v508 = vpop.f32.mrf.mxu0
      %v509 = vadd.f32 %v329, %v508
      %510 = vmatprep.mubr.f32.mxu0 0.0
      %511 = vmatmul.mubr.f32.gmra.mxu0 %v345
      %v512 = vpop.f32.mrf.mxu0
      %v513 = vadd.f32 %v325, %v512
      %v514 = vpop.f32.mrf.mxu0
      %v515 = vadd.f32 %v329, %v514
      %516 = vmatprep.mubr.f32.mxu0 0.0
      %517 = vmatmul.mubr.f32.gmra.mxu0 %v348
      %v518 = vpop.f32.mrf.mxu0
      %v519 = vadd.f32 %v325, %v518
      %v520 = vpop.f32.mrf.mxu0
      %v521 = vadd.f32 %v329, %v520
      %522 = vmatprep.mubr.f32.mxu0 0.0
      %523 = vmatmul.mubr.f32.gmra.mxu0 %v351
      %v524 = vpop.f32.mrf.mxu0
      %v525 = vadd.f32 %v325, %v524
      %v526 = vpop.f32.mrf.mxu0
      %v527 = vadd.f32 %v329, %v526
      %528 = vmatprep.mubr.f32.mxu0 0.0
      %529 = vmatmul.mubr.f32.gmra.mxu0 %v354
      %v530 = vpop.f32.mrf.mxu0
      %v531 = vadd.f32 %v325, %v530
      %v532 = vpop.f32.mrf.mxu0
      %v533 = vadd.f32 %v329, %v532
      %534 = vmatprep.mubr.f32.mxu0 0.0
      %535 = vmatmul.mubr.f32.gmra.mxu0 %v357
      %v536 = vpop.f32.mrf.mxu0
      %v537 = vadd.f32 %v325, %v536
      %v538 = vpop.f32.mrf.mxu0
      %v539 = vadd.f32 %v329, %v538
      %540 = vmatprep.mubr.f32.mxu0 0.0
      %541 = vmatmul.mubr.f32.gmra.mxu0 %v360
      %v542 = vpop.f32.mrf.mxu0
      %v543 = vadd.f32 %v325, %v542
      %v544 = vpop.f32.mrf.mxu0
      %v545 = vadd.f32 %v329, %v544
      %546 = vmatprep.mubr.f32.mxu0 0.0
      %547 = vmatmul.mubr.f32.gmra.mxu0 %v363
      %v548 = vpop.f32.mrf.mxu0
      %v549 = vadd.f32 %v325, %v548
      %v550 = vpop.f32.mrf.mxu0
      %v551 = vadd.f32 %v329, %v550
      %552 = vmatprep.mubr.f32.mxu0 0.0
      %553 = vmatmul.mubr.f32.gmra.mxu0 %v366
      %v554 = vpop.f32.mrf.mxu0
      %v555 = vadd.f32 %v325, %v554
      %v556 = vpop.f32.mrf.mxu0
      %v557 = vadd.f32 %v329, %v556
      %558 = vmatprep.mubr.f32.mxu0 0.0
      %559 = vmatmul.mubr.f32.gmra.mxu0 %v369
      %v560 = vpop.f32.mrf.mxu0
      %v561 = vadd.f32 %v325, %v560
      %v562 = vpop.f32.mrf.mxu0
      %v563 = vadd.f32 %v329, %v562
      %564 = vmatprep.mubr.f32.mxu0 0.0
      %565 = vmatmul.mubr.f32.gmra.mxu0 %v372
      %v566 = vpop.f32.mrf.mxu0
      %v567 = vadd.f32 %v325, %v566
      %v568 = vpop.f32.mrf.mxu0
      %v569 = vadd.f32 %v329, %v568
      %570 = vmatprep.mubr.f32.mxu0 0.0
      %571 = vmatmul.mubr.f32.gmra.mxu0 %v375
      %v572 = vpop.f32.mrf.mxu0
      %v573 = vadd.f32 %v325, %v572
      %v574 = vpop.f32.mrf.mxu0
      %v575 = vadd.f32 %v329, %v574
      %576 = vmatprep.mubr.f32.mxu0 0.0
      %577 = vmatmul.mubr.f32.gmra.mxu0 %v378
      %v578 = vpop.f32.mrf.mxu0
      %v579 = vadd.f32 %v325, %v578
      %v580 = vpop.f32.mrf.mxu0
      %v581 = vadd.f32 %v329, %v580
      %582 = vmatprep.mubr.f32.mxu0 0.0
      %583 = vmatmul.mubr.f32.gmra.mxu0 %v381
      %v584 = vpop.f32.mrf.mxu0
      %v585 = vadd.f32 %v325, %v584
      %v586 = vpop.f32.mrf.mxu0
      %v587 = vadd.f32 %v329, %v586
      %588 = vmatprep.mubr.f32.mxu0 0.0
      %589 = vmatmul.mubr.f32.gmra.mxu0 %v384
      %v590 = vpop.f32.mrf.mxu0
      %v591 = vadd.f32 %v325, %v590
      %v592 = vpop.f32.mrf.mxu0
      %v593 = vadd.f32 %v329, %v592
      %594 = vmatprep.mubr.f32.mxu0 0.0
      %595 = vmatmul.mubr.f32.gmra.mxu0 %v387
      %v596 = vpop.f32.mrf.mxu0
      %v597 = vadd.f32 %v325, %v596
      %v598 = vpop.f32.mrf.mxu0
      %v599 = vadd.f32 %v329, %v598
      %600 = vmatprep.mubr.f32.mxu0 0.0
      %601 = vmatmul.mubr.f32.gmra.mxu0 %v390
      %v602 = vpop.f32.mrf.mxu0
      %v603 = vadd.f32 %v325, %v602
      %v604 = vpop.f32.mrf.mxu0
      %v605 = vadd.f32 %v329, %v604
      %606 = vmatprep.mubr.f32.mxu0 0.0
      %607 = vmatmul.mubr.f32.gmra.mxu0 %v393
      %v608 = vpop.f32.mrf.mxu0
      %v609 = vadd.f32 %v325, %v608
      %v610 = vpop.f32.mrf.mxu0
      %v611 = vadd.f32 %v329, %v610
      %612 = vmatprep.mubr.f32.mxu0 0.0
      %613 = vmatmul.mubr.f32.gmra.mxu0 %v396
      %v614 = vpop.f32.mrf.mxu0
      %v615 = vadd.f32 %v325, %v614
      %v616 = vpop.f32.mrf.mxu0
      %v617 = vadd.f32 %v329, %v616
      %618 = vmatprep.mubr.f32.mxu0 0.0
      %619 = vmatmul.mubr.f32.gmra.mxu0 %v399
      %v620 = vpop.f32.mrf.mxu0
      %v621 = vadd.f32 %v325, %v620
      %v622 = vpop.f32.mrf.mxu0
      %v623 = vadd.f32 %v329, %v622
      %624 = vmatprep.mubr.f32.mxu0 0.0
      %625 = vmatmul.mubr.f32.gmra.mxu0 %v402
      %v626 = vpop.f32.mrf.mxu0
      %v627 = vadd.f32 %v325, %v626
      %v628 = vpop.f32.mrf.mxu0
      %v629 = vadd.f32 %v329, %v628
      %630 = vmatprep.mubr.f32.mxu0 0.0
      %631 = vmatmul.mubr.f32.gmra.mxu0 %v405
      %v632 = vpop.f32.mrf.mxu0
      %v633 = vadd.f32 %v325, %v632
      %v634 = vpop.f32.mrf.mxu0
      %v635 = vadd.f32 %v329, %v634
      %636 = vmatprep.mubr.f32.mxu0 0.0
      %637 = vmatmul.mubr.f32.gmra.mxu0 %v408
      %v638 = vpop.f32.mrf.mxu0
      %v639 = vadd.f32 %v325, %v638
      %v640 = vpop.f32.mrf.mxu0
      %v641 = vadd.f32 %v329, %v640
      %642 = vmatprep.mubr.f32.mxu0 0.0
      %643 = vmatmul.mubr.f32.gmra.mxu0 %v411
      %v644 = vpop.f32.mrf.mxu0
      %v645 = vadd.f32 %v325, %v644
      %v646 = vpop.f32.mrf.mxu0
      %v647 = vadd.f32 %v329, %v646
      %648 = vmatprep.mubr.f32.mxu0 0.0
      %649 = vmatmul.mubr.f32.gmra.mxu0 %v414
      %v650 = vpop.f32.mrf.mxu0
      %v651 = vadd.f32 %v325, %v650
      %v652 = vpop.f32.mrf.mxu0
      %v653 = vadd.f32 %v329, %v652
      %654 = vmatprep.mubr.f32.mxu0 0.0
      %655 = vmatmul.mubr.f32.gmra.mxu0 %v417
      %v656 = vpop.f32.mrf.mxu0
      %v657 = vadd.f32 %v325, %v656
      %v658 = vpop.f32.mrf.mxu0
      %v659 = vadd.f32 %v329, %v658
      %660 = vmatprep.mubr.f32.mxu0 0.0
      %661 = vmatmul.mubr.f32.gmra.mxu0 %v420
      %v662 = vpop.f32.mrf.mxu0
      %v663 = vadd.f32 %v325, %v662
      %v664 = vpop.f32.mrf.mxu0
      %v665 = vadd.f32 %v329, %v664
      %666 = vmatprep.mubr.f32.mxu0 0.0
      %667 = vmatmul.mubr.f32.gmra.mxu0 %v423
      %v668 = vpop.f32.mrf.mxu0
      %v669 = vadd.f32 %v325, %v668
      %v670 = vpop.f32.mrf.mxu0
      %v671 = vadd.f32 %v329, %v670
      %672 = vmatprep.mubr.f32.mxu0 0.0
      %673 = vmatmul.mubr.f32.gmra.mxu0 %v426
      %v674 = vpop.f32.mrf.mxu0
      %v675 = vadd.f32 %v325, %v674
      %v676 = vpop.f32.mrf.mxu0
      %v677 = vadd.f32 %v329, %v676
      %678 = vmatprep.mubr.f32.mxu0 0.0
      %679 = vmatmul.mubr.f32.gmra.mxu0 %v429
      %v680 = vpop.f32.mrf.mxu0
      %v681 = vadd.f32 %v325, %v680
      %v682 = vpop.f32.mrf.mxu0
      %v683 = vadd.f32 %v329, %v682
      %684 = vmatprep.mubr.f32.mxu0 0.0
      %685 = vmatmul.mubr.f32.gmra.mxu0 %v432
      %v686 = vpop.f32.mrf.mxu0
      %v687 = vadd.f32 %v325, %v686
      %v688 = vpop.f32.mrf.mxu0
      %v689 = vadd.f32 %v329, %v688
      %690 = vdwg.mxu0
      %691 = vmatprep.subr.mxu0 0.0
      %692 = vmatpush1.msra.mxu0 0.0
      %693 = vmatprep.subr.mxu0 0.0
      %694 = vmatpush1.msra.mxu0 0.0
      %695 = vmatprep.subr.mxu0 0.0
      %696 = vmatpush1.msra.mxu0 0.0
      %697 = vmatprep.subr.mxu0 0.0
      %698 = vmatpush1.msra.mxu0 0.0
      %699 = vmatprep.subr.mxu0 0.0
      %700 = vmatpush1.msra.mxu0 0.0
      %701 = vmatprep.subr.mxu0 0.0
      %702 = vmatpush1.msra.mxu0 0.0
      %703 = vmatprep.subr.mxu0 0.0
      %704 = vmatpush1.msra.mxu0 0.0
      %705 = vmatprep.subr.mxu0 0.0
      %706 = vmatpush1.msra.mxu0 0.0
      %707 = vmatprep.subr.mxu0 0.0
      %708 = vmatpush1.msra.mxu0 0.0
      %709 = vmatprep.subr.mxu0 0.0
      %710 = vmatpush1.msra.mxu0 0.0
      %711 = vmatprep.subr.mxu0 0.0
      %712 = vmatpush1.msra.mxu0 0.0
      %713 = vmatprep.subr.mxu0 0.0
      %714 = vmatpush1.msra.mxu0 0.0
      %715 = vmatprep.subr.mxu0 0.0
      %716 = vmatpush1.msra.mxu0 0.0
      %717 = vmatprep.subr.mxu0 0.0
      %718 = vmatpush1.msra.mxu0 0.0
      %719 = vmatprep.subr.mxu0 0.0
      %720 = vmatpush1.msra.mxu0 %v319
      %721 = vmatprep.subr.mxu0 0.0
      %722 = vmatpush1.msra.mxu0 %v316
      %723 = vmatprep.subr.mxu0 0.0
      %724 = vmatpush2.msra.mxu0 0.0
      %725 = vmatprep.subr.mxu0 0.0
      %726 = vmatpush2.msra.mxu0 0.0
      %727 = vmatprep.subr.mxu0 0.0
      %728 = vmatpush2.msra.mxu0 0.0
      %729 = vmatprep.subr.mxu0 0.0
      %730 = vmatpush2.msra.mxu0 0.0
      %731 = vmatprep.subr.mxu0 0.0
      %732 = vmatpush2.msra.mxu0 0.0
      %733 = vmatprep.subr.mxu0 0.0
      %734 = vmatpush2.msra.mxu0 0.0
      %735 = vmatprep.subr.mxu0 0.0
      %736 = vmatpush2.msra.mxu0 0.0
      %737 = vmatprep.subr.mxu0 0.0
      %738 = vmatpush2.msra.mxu0 0.0
      %739 = vmatprep.subr.mxu0 0.0
      %740 = vmatpush2.msra.mxu0 0.0
      %741 = vmatprep.subr.mxu0 0.0
      %742 = vmatpush2.msra.mxu0 0.0
      %743 = vmatprep.subr.mxu0 0.0
      %744 = vmatpush2.msra.mxu0 0.0
      %745 = vmatprep.subr.mxu0 0.0
      %746 = vmatpush2.msra.mxu0 0.0
      %747 = vmatprep.subr.mxu0 0.0
      %748 = vmatpush2.msra.mxu0 0.0
      %749 = vmatprep.subr.mxu0 0.0
      %750 = vmatpush2.msra.mxu0 0.0
      %751 = vmatprep.subr.mxu0 0.0
      %752 = vmatpush2.msra.mxu0 0.0
      %753 = vmatprep.subr.mxu0 0.0
      %754 = vmatpush2.msra.mxu0 0.0
      %755 = vmatprep.mubr.f32.mxu0 0.0
      %756 = vmatmul.mubr.f32.gmra.mxu0 %v339
      %v757 = vpop.f32.mrf.mxu0
      %v758 = vadd.f32 %v333, %v757
      %v759 = vpop.f32.mrf.mxu0
      %760 = vmatprep.mubr.f32.mxu0 0.0
      %761 = vmatmul.mubr.f32.gmra.mxu0 %v342
      %v762 = vpop.f32.mrf.mxu0
      %v763 = vadd.f32 %v333, %v762
      %v764 = vpop.f32.mrf.mxu0
      %765 = vmatprep.mubr.f32.mxu0 0.0
      %766 = vmatmul.mubr.f32.gmra.mxu0 %v345
      %v767 = vpop.f32.mrf.mxu0
      %v768 = vadd.f32 %v333, %v767
      %v769 = vpop.f32.mrf.mxu0
      %770 = vmatprep.mubr.f32.mxu0 0.0
      %771 = vmatmul.mubr.f32.gmra.mxu0 %v348
      %v772 = vpop.f32.mrf.mxu0
      %v773 = vadd.f32 %v333, %v772
      %v774 = vpop.f32.mrf.mxu0
      %775 = vmatprep.mubr.f32.mxu0 0.0
      %776 = vmatmul.mubr.f32.gmra.mxu0 %v351
      %v777 = vpop.f32.mrf.mxu0
      %v778 = vadd.f32 %v333, %v777
      %v779 = vpop.f32.mrf.mxu0
      %780 = vmatprep.mubr.f32.mxu0 0.0
      %781 = vmatmul.mubr.f32.gmra.mxu0 %v354
      %v782 = vpop.f32.mrf.mxu0
      %v783 = vadd.f32 %v333, %v782
      %v784 = vpop.f32.mrf.mxu0
      %785 = vmatprep.mubr.f32.mxu0 0.0
      %786 = vmatmul.mubr.f32.gmra.mxu0 %v357
      %v787 = vpop.f32.mrf.mxu0
      %v788 = vadd.f32 %v333, %v787
      %v789 = vpop.f32.mrf.mxu0
      %790 = vmatprep.mubr.f32.mxu0 0.0
      %791 = vmatmul.mubr.f32.gmra.mxu0 %v360
      %v792 = vpop.f32.mrf.mxu0
      %v793 = vadd.f32 %v333, %v792
      %v794 = vpop.f32.mrf.mxu0
      %795 = vmatprep.mubr.f32.mxu0 0.0
      %796 = vmatmul.mubr.f32.gmra.mxu0 %v363
      %v797 = vpop.f32.mrf.mxu0
      %v798 = vadd.f32 %v333, %v797
      %v799 = vpop.f32.mrf.mxu0
      %800 = vmatprep.mubr.f32.mxu0 0.0
      %801 = vmatmul.mubr.f32.gmra.mxu0 %v366
      %v802 = vpop.f32.mrf.mxu0
      %v803 = vadd.f32 %v333, %v802
      %v804 = vpop.f32.mrf.mxu0
      %805 = vmatprep.mubr.f32.mxu0 0.0
      %806 = vmatmul.mubr.f32.gmra.mxu0 %v369
      %v807 = vpop.f32.mrf.mxu0
      %v808 = vadd.f32 %v333, %v807
      %v809 = vpop.f32.mrf.mxu0
      %810 = vmatprep.mubr.f32.mxu0 0.0
      %811 = vmatmul.mubr.f32.gmra.mxu0 %v372
      %v812 = vpop.f32.mrf.mxu0
      %v813 = vadd.f32 %v333, %v812
      %v814 = vpop.f32.mrf.mxu0
      %815 = vmatprep.mubr.f32.mxu0 0.0
      %816 = vmatmul.mubr.f32.gmra.mxu0 %v375
      %v817 = vpop.f32.mrf.mxu0
      %v818 = vadd.f32 %v333, %v817
      %v819 = vpop.f32.mrf.mxu0
      %820 = vmatprep.mubr.f32.mxu0 0.0
      %821 = vmatmul.mubr.f32.gmra.mxu0 %v378
      %v822 = vpop.f32.mrf.mxu0
      %v823 = vadd.f32 %v333, %v822
      %v824 = vpop.f32.mrf.mxu0
      %825 = vmatprep.mubr.f32.mxu0 0.0
      %826 = vmatmul.mubr.f32.gmra.mxu0 %v381
      %v827 = vpop.f32.mrf.mxu0
      %v828 = vadd.f32 %v333, %v827
      %v829 = vpop.f32.mrf.mxu0
      %830 = vmatprep.mubr.f32.mxu0 0.0
      %831 = vmatmul.mubr.f32.gmra.mxu0 %v384
      %v832 = vpop.f32.mrf.mxu0
      %v833 = vadd.f32 %v333, %v832
      %v834 = vpop.f32.mrf.mxu0
      %835 = vmatprep.mubr.f32.mxu0 0.0
      %836 = vmatmul.mubr.f32.gmra.mxu0 %v387
      %v837 = vpop.f32.mrf.mxu0
      %v838 = vadd.f32 %v333, %v837
      %v839 = vpop.f32.mrf.mxu0
      %840 = vmatprep.mubr.f32.mxu0 0.0
      %841 = vmatmul.mubr.f32.gmra.mxu0 %v390
      %v842 = vpop.f32.mrf.mxu0
      %v843 = vadd.f32 %v333, %v842
      %v844 = vpop.f32.mrf.mxu0
      %845 = vmatprep.mubr.f32.mxu0 0.0
      %846 = vmatmul.mubr.f32.gmra.mxu0 %v393
      %v847 = vpop.f32.mrf.mxu0
      %v848 = vadd.f32 %v333, %v847
      %v849 = vpop.f32.mrf.mxu0
      %850 = vmatprep.mubr.f32.mxu0 0.0
      %851 = vmatmul.mubr.f32.gmra.mxu0 %v396
      %v852 = vpop.f32.mrf.mxu0
      %v853 = vadd.f32 %v333, %v852
      %v854 = vpop.f32.mrf.mxu0
      %855 = vmatprep.mubr.f32.mxu0 0.0
      %856 = vmatmul.mubr.f32.gmra.mxu0 %v399
      %v857 = vpop.f32.mrf.mxu0
      %v858 = vadd.f32 %v333, %v857
      %v859 = vpop.f32.mrf.mxu0
      %860 = vmatprep.mubr.f32.mxu0 0.0
      %861 = vmatmul.mubr.f32.gmra.mxu0 %v402
      %v862 = vpop.f32.mrf.mxu0
      %v863 = vadd.f32 %v333, %v862
      %v864 = vpop.f32.mrf.mxu0
      %865 = vmatprep.mubr.f32.mxu0 0.0
      %866 = vmatmul.mubr.f32.gmra.mxu0 %v405
      %v867 = vpop.f32.mrf.mxu0
      %v868 = vadd.f32 %v333, %v867
      %v869 = vpop.f32.mrf.mxu0
      %870 = vmatprep.mubr.f32.mxu0 0.0
      %871 = vmatmul.mubr.f32.gmra.mxu0 %v408
      %v872 = vpop.f32.mrf.mxu0
      %v873 = vadd.f32 %v333, %v872
      %v874 = vpop.f32.mrf.mxu0
      %875 = vmatprep.mubr.f32.mxu0 0.0
      %876 = vmatmul.mubr.f32.gmra.mxu0 %v411
      %v877 = vpop.f32.mrf.mxu0
      %v878 = vadd.f32 %v333, %v877
      %v879 = vpop.f32.mrf.mxu0
      %880 = vmatprep.mubr.f32.mxu0 0.0
      %881 = vmatmul.mubr.f32.gmra.mxu0 %v414
      %v882 = vpop.f32.mrf.mxu0
      %v883 = vadd.f32 %v333, %v882
      %v884 = vpop.f32.mrf.mxu0
      %885 = vmatprep.mubr.f32.mxu0 0.0
      %886 = vmatmul.mubr.f32.gmra.mxu0 %v417
      %v887 = vpop.f32.mrf.mxu0
      %v888 = vadd.f32 %v333, %v887
      %v889 = vpop.f32.mrf.mxu0
      %890 = vmatprep.mubr.f32.mxu0 0.0
      %891 = vmatmul.mubr.f32.gmra.mxu0 %v420
      %v892 = vpop.f32.mrf.mxu0
      %v893 = vadd.f32 %v333, %v892
      %v894 = vpop.f32.mrf.mxu0
      %895 = vmatprep.mubr.f32.mxu0 0.0
      %896 = vmatmul.mubr.f32.gmra.mxu0 %v423
      %v897 = vpop.f32.mrf.mxu0
      %v898 = vadd.f32 %v333, %v897
      %v899 = vpop.f32.mrf.mxu0
      %900 = vmatprep.mubr.f32.mxu0 0.0
      %901 = vmatmul.mubr.f32.gmra.mxu0 %v426
      %v902 = vpop.f32.mrf.mxu0
      %v903 = vadd.f32 %v333, %v902
      %v904 = vpop.f32.mrf.mxu0
      %905 = vmatprep.mubr.f32.mxu0 0.0
      %906 = vmatmul.mubr.f32.gmra.mxu0 %v429
      %v907 = vpop.f32.mrf.mxu0
      %v908 = vadd.f32 %v333, %v907
      %v909 = vpop.f32.mrf.mxu0
      %910 = vmatprep.mubr.f32.mxu0 0.0
      %911 = vmatmul.mubr.f32.gmra.mxu0 %v432
      %v912 = vpop.f32.mrf.mxu0
      %v913 = vadd.f32 %v333, %v912
      %v914 = vpop.f32.mrf.mxu0
      %915 = vdwg.mxu0
      %v916 = vmul.f32 %v501, 0.5
      %v917 = vmul.f32 %v507, 0.5
      %v918 = vmul.f32 %v513, 0.5
      %v919 = vmul.f32 %v519, 0.5
      %v920 = vmul.f32 %v525, 0.5
      %v921 = vmul.f32 %v531, 0.5
      %v922 = vmul.f32 %v537, 0.5
      %v923 = vmul.f32 %v543, 0.5
      %v924 = vmul.f32 %v549, 0.5
      %v925 = vmul.f32 %v555, 0.5
      %v926 = vmul.f32 %v561, 0.5
      %v927 = vmul.f32 %v567, 0.5
      %v928 = vmul.f32 %v573, 0.5
      %v929 = vmul.f32 %v579, 0.5
      %v930 = vmul.f32 %v585, 0.5
      %v931 = vmul.f32 %v591, 0.5
      %v932 = vmul.f32 %v597, 0.5
      %v933 = vmul.f32 %v603, 0.5
      %v934 = vmul.f32 %v609, 0.5
      %v935 = vmul.f32 %v615, 0.5
      %v936 = vmul.f32 %v621, 0.5
      %v937 = vmul.f32 %v627, 0.5
      %v938 = vmul.f32 %v633, 0.5
      %v939 = vmul.f32 %v639, 0.5
      %v940 = vmul.f32 %v645, 0.5
      %v941 = vmul.f32 %v651, 0.5
      %v942 = vmul.f32 %v657, 0.5
      %v943 = vmul.f32 %v663, 0.5
      %v944 = vmul.f32 %v669, 0.5
      %v945 = vmul.f32 %v675, 0.5
      %v946 = vmul.f32 %v681, 0.5
      %v947 = vmul.f32 %v687, 0.5
      %v948 = vtanh.pop %v916
      %v949 = vtanh.pop %v917
      %v950 = vtanh.pop %v918
      %v951 = vtanh.pop %v919
      %v952 = vtanh.pop %v920
      %v953 = vtanh.pop %v921
      %v954 = vtanh.pop %v922
      %v955 = vtanh.pop %v923
      %v956 = vtanh.pop %v924
      %v957 = vtanh.pop %v925
      %v958 = vtanh.pop %v926
      %v959 = vtanh.pop %v927
      %v960 = vtanh.pop %v928
      %v961 = vtanh.pop %v929
      %v962 = vtanh.pop %v930
      %v963 = vtanh.pop %v931
      %v964 = vtanh.pop %v932
      %v965 = vtanh.pop %v933
      %v966 = vtanh.pop %v934
      %v967 = vtanh.pop %v935
      %v968 = vtanh.pop %v936
      %v969 = vtanh.pop %v937
      %v970 = vtanh.pop %v938
      %v971 = vtanh.pop %v939
      %v972 = vtanh.pop %v940
      %v973 = vtanh.pop %v941
      %v974 = vtanh.pop %v942
      %v975 = vtanh.pop %v943
      %v976 = vtanh.pop %v944
      %v977 = vtanh.pop %v945
      %v978 = vtanh.pop %v946
      %v979 = vtanh.pop %v947
      %v980 = vadd.f32 %v948, 1.0
      %v981 = vadd.f32 %v949, 1.0
      %v982 = vadd.f32 %v950, 1.0
      %v983 = vadd.f32 %v951, 1.0
      %v984 = vadd.f32 %v952, 1.0
      %v985 = vadd.f32 %v953, 1.0
      %v986 = vadd.f32 %v954, 1.0
      %v987 = vadd.f32 %v955, 1.0
      %v988 = vadd.f32 %v956, 1.0
      %v989 = vadd.f32 %v957, 1.0
      %v990 = vadd.f32 %v958, 1.0
      %v991 = vadd.f32 %v959, 1.0
      %v992 = vadd.f32 %v960, 1.0
      %v993 = vadd.f32 %v961, 1.0
      %v994 = vadd.f32 %v962, 1.0
      %v995 = vadd.f32 %v963, 1.0
      %v996 = vadd.f32 %v964, 1.0
      %v997 = vadd.f32 %v965, 1.0
      %v998 = vadd.f32 %v966, 1.0
      %v999 = vadd.f32 %v967, 1.0
      %v1000 = vadd.f32 %v968, 1.0
      %v1001 = vadd.f32 %v969, 1.0
      %v1002 = vadd.f32 %v970, 1.0
      %v1003 = vadd.f32 %v971, 1.0
      %v1004 = vadd.f32 %v972, 1.0
      %v1005 = vadd.f32 %v973, 1.0
      %v1006 = vadd.f32 %v974, 1.0
      %v1007 = vadd.f32 %v975, 1.0
      %v1008 = vadd.f32 %v976, 1.0
      %v1009 = vadd.f32 %v977, 1.0
      %v1010 = vadd.f32 %v978, 1.0
      %v1011 = vadd.f32 %v979, 1.0
      %v1012 = vmul.f32 %v980, 0.5
      %v1013 = vmul.f32 %v981, 0.5
      %v1014 = vmul.f32 %v982, 0.5
      %v1015 = vmul.f32 %v983, 0.5
      %v1016 = vmul.f32 %v984, 0.5
      %v1017 = vmul.f32 %v985, 0.5
      %v1018 = vmul.f32 %v986, 0.5
      %v1019 = vmul.f32 %v987, 0.5
      %v1020 = vmul.f32 %v988, 0.5
      %v1021 = vmul.f32 %v989, 0.5
      %v1022 = vmul.f32 %v990, 0.5
      %v1023 = vmul.f32 %v991, 0.5
      %v1024 = vmul.f32 %v992, 0.5
      %v1025 = vmul.f32 %v993, 0.5
      %v1026 = vmul.f32 %v994, 0.5
      %v1027 = vmul.f32 %v995, 0.5
      %v1028 = vmul.f32 %v996, 0.5
      %v1029 = vmul.f32 %v997, 0.5
      %v1030 = vmul.f32 %v998, 0.5
      %v1031 = vmul.f32 %v999, 0.5
      %v1032 = vmul.f32 %v1000, 0.5
      %v1033 = vmul.f32 %v1001, 0.5
      %v1034 = vmul.f32 %v1002, 0.5
      %v1035 = vmul.f32 %v1003, 0.5
      %v1036 = vmul.f32 %v1004, 0.5
      %v1037 = vmul.f32 %v1005, 0.5
      %v1038 = vmul.f32 %v1006, 0.5
      %v1039 = vmul.f32 %v1007, 0.5
      %v1040 = vmul.f32 %v1008, 0.5
      %v1041 = vmul.f32 %v1009, 0.5
      %v1042 = vmul.f32 %v1010, 0.5
      %v1043 = vmul.f32 %v1011, 0.5
      %v1044 = vtanh.pop %v503
      %v1045 = vtanh.pop %v509
      %v1046 = vtanh.pop %v515
      %v1047 = vtanh.pop %v521
      %v1048 = vtanh.pop %v527
      %v1049 = vtanh.pop %v533
      %v1050 = vtanh.pop %v539
      %v1051 = vtanh.pop %v545
      %v1052 = vtanh.pop %v551
      %v1053 = vtanh.pop %v557
      %v1054 = vtanh.pop %v563
      %v1055 = vtanh.pop %v569
      %v1056 = vtanh.pop %v575
      %v1057 = vtanh.pop %v581
      %v1058 = vtanh.pop %v587
      %v1059 = vtanh.pop %v593
      %v1060 = vtanh.pop %v599
      %v1061 = vtanh.pop %v605
      %v1062 = vtanh.pop %v611
      %v1063 = vtanh.pop %v617
      %v1064 = vtanh.pop %v623
      %v1065 = vtanh.pop %v629
      %v1066 = vtanh.pop %v635
      %v1067 = vtanh.pop %v641
      %v1068 = vtanh.pop %v647
      %v1069 = vtanh.pop %v653
      %v1070 = vtanh.pop %v659
      %v1071 = vtanh.pop %v665
      %v1072 = vtanh.pop %v671
      %v1073 = vtanh.pop %v677
      %v1074 = vtanh.pop %v683
      %v1075 = vtanh.pop %v689
      %v1076 = vmul.f32 %v758, 0.5
      %v1077 = vmul.f32 %v763, 0.5
      %v1078 = vmul.f32 %v768, 0.5
      %v1079 = vmul.f32 %v773, 0.5
      %v1080 = vmul.f32 %v778, 0.5
      %v1081 = vmul.f32 %v783, 0.5
      %v1082 = vmul.f32 %v788, 0.5
      %v1083 = vmul.f32 %v793, 0.5
      %v1084 = vmul.f32 %v798, 0.5
      %v1085 = vmul.f32 %v803, 0.5
      %v1086 = vmul.f32 %v808, 0.5
      %v1087 = vmul.f32 %v813, 0.5
      %v1088 = vmul.f32 %v818, 0.5
      %v1089 = vmul.f32 %v823, 0.5
      %v1090 = vmul.f32 %v828, 0.5
      %v1091 = vmul.f32 %v833, 0.5
      %v1092 = vmul.f32 %v838, 0.5
      %v1093 = vmul.f32 %v843, 0.5
      %v1094 = vmul.f32 %v848, 0.5
      %v1095 = vmul.f32 %v853, 0.5
      %v1096 = vmul.f32 %v858, 0.5
      %v1097 = vmul.f32 %v863, 0.5
      %v1098 = vmul.f32 %v868, 0.5
      %v1099 = vmul.f32 %v873, 0.5
      %v1100 = vmul.f32 %v878, 0.5
      %v1101 = vmul.f32 %v883, 0.5
      %v1102 = vmul.f32 %v888, 0.5
      %v1103 = vmul.f32 %v893, 0.5
      %v1104 = vmul.f32 %v898, 0.5
      %v1105 = vmul.f32 %v903, 0.5
      %v1106 = vmul.f32 %v908, 0.5
      %v1107 = vmul.f32 %v913, 0.5
      %v1108 = vtanh.pop %v1076
      %v1109 = vtanh.pop %v1077
      %v1110 = vtanh.pop %v1078
      %v1111 = vtanh.pop %v1079
      %v1112 = vtanh.pop %v1080
      %v1113 = vtanh.pop %v1081
      %v1114 = vtanh.pop %v1082
      %v1115 = vtanh.pop %v1083
      %v1116 = vtanh.pop %v1084
      %v1117 = vtanh.pop %v1085
      %v1118 = vtanh.pop %v1086
      %v1119 = vtanh.pop %v1087
      %v1120 = vtanh.pop %v1088
      %v1121 = vtanh.pop %v1089
      %v1122 = vtanh.pop %v1090
      %v1123 = vtanh.pop %v1091
      %v1124 = vtanh.pop %v1092
      %v1125 = vtanh.pop %v1093
      %v1126 = vtanh.pop %v1094
      %v1127 = vtanh.pop %v1095
      %v1128 = vtanh.pop %v1096
      %v1129 = vtanh.pop %v1097
      %v1130 = vtanh.pop %v1098
      %v1131 = vtanh.pop %v1099
      %v1132 = vtanh.pop %v1100
      %v1133 = vtanh.pop %v1101
      %v1134 = vtanh.pop %v1102
      %v1135 = vtanh.pop %v1103
      %v1136 = vtanh.pop %v1104
      %v1137 = vtanh.pop %v1105
      %v1138 = vtanh.pop %v1106
      %v1139 = vtanh.pop %v1107
      %v1140 = vadd.f32 %v1108, 1.0
      %v1141 = vadd.f32 %v1109, 1.0
      %v1142 = vadd.f32 %v1110, 1.0
      %v1143 = vadd.f32 %v1111, 1.0
      %v1144 = vadd.f32 %v1112, 1.0
      %v1145 = vadd.f32 %v1113, 1.0
      %v1146 = vadd.f32 %v1114, 1.0
      %v1147 = vadd.f32 %v1115, 1.0
      %v1148 = vadd.f32 %v1116, 1.0
      %v1149 = vadd.f32 %v1117, 1.0
      %v1150 = vadd.f32 %v1118, 1.0
      %v1151 = vadd.f32 %v1119, 1.0
      %v1152 = vadd.f32 %v1120, 1.0
      %v1153 = vadd.f32 %v1121, 1.0
      %v1154 = vadd.f32 %v1122, 1.0
      %v1155 = vadd.f32 %v1123, 1.0
      %v1156 = vadd.f32 %v1124, 1.0
      %v1157 = vadd.f32 %v1125, 1.0
      %v1158 = vadd.f32 %v1126, 1.0
      %v1159 = vadd.f32 %v1127, 1.0
      %v1160 = vadd.f32 %v1128, 1.0
      %v1161 = vadd.f32 %v1129, 1.0
      %v1162 = vadd.f32 %v1130, 1.0
      %v1163 = vadd.f32 %v1131, 1.0
      %v1164 = vadd.f32 %v1132, 1.0
      %v1165 = vadd.f32 %v1133, 1.0
      %v1166 = vadd.f32 %v1134, 1.0
      %v1167 = vadd.f32 %v1135, 1.0
      %v1168 = vadd.f32 %v1136, 1.0
      %v1169 = vadd.f32 %v1137, 1.0
      %v1170 = vadd.f32 %v1138, 1.0
      %v1171 = vadd.f32 %v1139, 1.0
      %v1172 = vmul.f32 %v1140, 0.5
      %v1173 = vmul.f32 %v1141, 0.5
      %v1174 = vmul.f32 %v1142, 0.5
      %v1175 = vmul.f32 %v1143, 0.5
      %v1176 = vmul.f32 %v1144, 0.5
      %v1177 = vmul.f32 %v1145, 0.5
      %v1178 = vmul.f32 %v1146, 0.5
      %v1179 = vmul.f32 %v1147, 0.5
      %v1180 = vmul.f32 %v1148, 0.5
      %v1181 = vmul.f32 %v1149, 0.5
      %v1182 = vmul.f32 %v1150, 0.5
      %v1183 = vmul.f32 %v1151, 0.5
      %v1184 = vmul.f32 %v1152, 0.5
      %v1185 = vmul.f32 %v1153, 0.5
      %v1186 = vmul.f32 %v1154, 0.5
      %v1187 = vmul.f32 %v1155, 0.5
      %v1188 = vmul.f32 %v1156, 0.5
      %v1189 = vmul.f32 %v1157, 0.5
      %v1190 = vmul.f32 %v1158, 0.5
      %v1191 = vmul.f32 %v1159, 0.5
      %v1192 = vmul.f32 %v1160, 0.5
      %v1193 = vmul.f32 %v1161, 0.5
      %v1194 = vmul.f32 %v1162, 0.5
      %v1195 = vmul.f32 %v1163, 0.5
      %v1196 = vmul.f32 %v1164, 0.5
      %v1197 = vmul.f32 %v1165, 0.5
      %v1198 = vmul.f32 %v1166, 0.5
      %v1199 = vmul.f32 %v1167, 0.5
      %v1200 = vmul.f32 %v1168, 0.5
      %v1201 = vmul.f32 %v1169, 0.5
      %v1202 = vmul.f32 %v1170, 0.5
      %v1203 = vmul.f32 %v1171, 0.5
      %v1204 = vmul.f32 %v1012, %v1044
      %v1205 = vmul.f32 %v1013, %v1045
      %v1206 = vmul.f32 %v1014, %v1046
      %v1207 = vmul.f32 %v1015, %v1047
      %v1208 = vmul.f32 %v1016, %v1048
      %v1209 = vmul.f32 %v1017, %v1049
      %v1210 = vmul.f32 %v1018, %v1050
      %v1211 = vmul.f32 %v1019, %v1051
      %v1212 = vmul.f32 %v1020, %v1052
      %v1213 = vmul.f32 %v1021, %v1053
      %v1214 = vmul.f32 %v1022, %v1054
      %v1215 = vmul.f32 %v1023, %v1055
      %v1216 = vmul.f32 %v1024, %v1056
      %v1217 = vmul.f32 %v1025, %v1057
      %v1218 = vmul.f32 %v1026, %v1058
      %v1219 = vmul.f32 %v1027, %v1059
      %v1220 = vmul.f32 %v1028, %v1060
      %v1221 = vmul.f32 %v1029, %v1061
      %v1222 = vmul.f32 %v1030, %v1062
      %v1223 = vmul.f32 %v1031, %v1063
      %v1224 = vmul.f32 %v1032, %v1064
      %v1225 = vmul.f32 %v1033, %v1065
      %v1226 = vmul.f32 %v1034, %v1066
      %v1227 = vmul.f32 %v1035, %v1067
      %v1228 = vmul.f32 %v1036, %v1068
      %v1229 = vmul.f32 %v1037, %v1069
      %v1230 = vmul.f32 %v1038, %v1070
      %v1231 = vmul.f32 %v1039, %v1071
      %v1232 = vmul.f32 %v1040, %v1072
      %v1233 = vmul.f32 %v1041, %v1073
      %v1234 = vmul.f32 %v1042, %v1074
      %v1235 = vmul.f32 %v1043, %v1075
      %v1236 = vtanh.pop %v1204
      %v1237 = vtanh.pop %v1205
      %v1238 = vtanh.pop %v1206
      %v1239 = vtanh.pop %v1207
      %v1240 = vtanh.pop %v1208
      %v1241 = vtanh.pop %v1209
      %v1242 = vtanh.pop %v1210
      %v1243 = vtanh.pop %v1211
      %v1244 = vtanh.pop %v1212
      %v1245 = vtanh.pop %v1213
      %v1246 = vtanh.pop %v1214
      %v1247 = vtanh.pop %v1215
      %v1248 = vtanh.pop %v1216
      %v1249 = vtanh.pop %v1217
      %v1250 = vtanh.pop %v1218
      %v1251 = vtanh.pop %v1219
      %v1252 = vtanh.pop %v1220
      %v1253 = vtanh.pop %v1221
      %v1254 = vtanh.pop %v1222
      %v1255 = vtanh.pop %v1223
      %v1256 = vtanh.pop %v1224
      %v1257 = vtanh.pop %v1225
      %v1258 = vtanh.pop %v1226
      %v1259 = vtanh.pop %v1227
      %v1260 = vtanh.pop %v1228
      %v1261 = vtanh.pop %v1229
      %v1262 = vtanh.pop %v1230
      %v1263 = vtanh.pop %v1231
      %v1264 = vtanh.pop %v1232
      %v1265 = vtanh.pop %v1233
      %v1266 = vtanh.pop %v1234
      %v1267 = vtanh.pop %v1235
      %v1268 = vmul.f32 %v1172, %v1236
      %v1269 = vmul.f32 %v1173, %v1237
      %v1270 = vmul.f32 %v1174, %v1238
      %v1271 = vmul.f32 %v1175, %v1239
      %v1272 = vmul.f32 %v1176, %v1240
      %v1273 = vmul.f32 %v1177, %v1241
      %v1274 = vmul.f32 %v1178, %v1242
      %v1275 = vmul.f32 %v1179, %v1243
      %v1276 = vmul.f32 %v1180, %v1244
      %v1277 = vmul.f32 %v1181, %v1245
      %v1278 = vmul.f32 %v1182, %v1246
      %v1279 = vmul.f32 %v1183, %v1247
      %v1280 = vmul.f32 %v1184, %v1248
      %v1281 = vmul.f32 %v1185, %v1249
      %v1282 = vmul.f32 %v1186, %v1250
      %v1283 = vmul.f32 %v1187, %v1251
      %v1284 = vmul.f32 %v1188, %v1252
      %v1285 = vmul.f32 %v1189, %v1253
      %v1286 = vmul.f32 %v1190, %v1254
      %v1287 = vmul.f32 %v1191, %v1255
      %v1288 = vmul.f32 %v1192, %v1256
      %v1289 = vmul.f32 %v1193, %v1257
      %v1290 = vmul.f32 %v1194, %v1258
      %v1291 = vmul.f32 %v1195, %v1259
      %v1292 = vmul.f32 %v1196, %v1260
      %v1293 = vmul.f32 %v1197, %v1261
      %v1294 = vmul.f32 %v1198, %v1262
      %v1295 = vmul.f32 %v1199, %v1263
      %v1296 = vmul.f32 %v1200, %v1264
      %v1297 = vmul.f32 %v1201, %v1265
      %v1298 = vmul.f32 %v1202, %v1266
      %v1299 = vmul.f32 %v1203, %v1267
      %v1300 = vld [vmem:[%s3] sm:$0xff]
      %v1301 = vld [vmem:[%s3 + $0x8] sm:$0xff]
      %v1302 = vld [vmem:[%s3 + $0x10] sm:$0xff]
      %v1303 = vld [vmem:[%s3 + $0x18] sm:$0xff]
      %v1304 = vld [vmem:[%s3 + $0x20] sm:$0xff]
      %v1305 = vld [vmem:[%s3 + $0x28] sm:$0xff]
      %v1306 = vld [vmem:[%s3 + $0x30] sm:$0xff]
      %v1307 = vld [vmem:[%s3 + $0x38] sm:$0xff]
      %v1308 = vld [vmem:[%s3 + $0x40] sm:$0xff]
      %v1309 = vld [vmem:[%s3 + $0x48] sm:$0xff]
      %v1310 = vld [vmem:[%s3 + $0x50] sm:$0xff]
      %v1311 = vld [vmem:[%s3 + $0x58] sm:$0xff]
      %v1312 = vld [vmem:[%s3 + $0x60] sm:$0xff]
      %v1313 = vld [vmem:[%s3 + $0x68] sm:$0xff]
      %v1314 = vld [vmem:[%s3 + $0x70] sm:$0xff]
      %v1315 = vld [vmem:[%s3 + $0x78] sm:$0xff]
      %v1316 = vld [vmem:[%s4] sm:$0x1]
      %v1318 = vlaneseq
      %v1319 = vshrl.u32 %v1318, 7
      %v1320 = vsub.s32 0, %v1319
      %v1321 = vrot.slane %v1316, %v1320
      %1323 = vmatprep.subr.mxu0 0.0
      %1324 = vmatpush1.msra.mxu0 %v1315
      %1325 = vmatprep.subr.mxu0 0.0
      %1326 = vmatpush1.msra.mxu0 %v1314
      %1327 = vmatprep.subr.mxu0 0.0
      %1328 = vmatpush1.msra.mxu0 %v1313
      %1329 = vmatprep.subr.mxu0 0.0
      %1330 = vmatpush1.msra.mxu0 %v1312
      %1331 = vmatprep.subr.mxu0 0.0
      %1332 = vmatpush1.msra.mxu0 %v1311
      %1333 = vmatprep.subr.mxu0 0.0
      %1334 = vmatpush1.msra.mxu0 %v1310
      %1335 = vmatprep.subr.mxu0 0.0
      %1336 = vmatpush1.msra.mxu0 %v1309
      %1337 = vmatprep.subr.mxu0 0.0
      %1338 = vmatpush1.msra.mxu0 %v1308
      %1339 = vmatprep.subr.mxu0 0.0
      %1340 = vmatpush1.msra.mxu0 %v1307
      %1341 = vmatprep.subr.mxu0 0.0
      %1342 = vmatpush1.msra.mxu0 %v1306
      %1343 = vmatprep.subr.mxu0 0.0
      %1344 = vmatpush1.msra.mxu0 %v1305
      %1345 = vmatprep.subr.mxu0 0.0
      %1346 = vmatpush1.msra.mxu0 %v1304
      %1347 = vmatprep.subr.mxu0 0.0
      %1348 = vmatpush1.msra.mxu0 %v1303
      %1349 = vmatprep.subr.mxu0 0.0
      %1350 = vmatpush1.msra.mxu0 %v1302
      %1351 = vmatprep.subr.mxu0 0.0
      %1352 = vmatpush1.msra.mxu0 %v1301
      %1353 = vmatprep.subr.mxu0 0.0
      %1354 = vmatpush1.msra.mxu0 %v1300
      %1355 = vmatprep.subr.mxu0 0.0
      %1356 = vmatpush2.msra.mxu0 0.0
      %1357 = vmatprep.subr.mxu0 0.0
      %1358 = vmatpush2.msra.mxu0 0.0
      %1359 = vmatprep.subr.mxu0 0.0
      %1360 = vmatpush2.msra.mxu0 0.0
      %1361 = vmatprep.subr.mxu0 0.0
      %1362 = vmatpush2.msra.mxu0 0.0
      %1363 = vmatprep.subr.mxu0 0.0
      %1364 = vmatpush2.msra.mxu0 0.0
      %1365 = vmatprep.subr.mxu0 0.0
      %1366 = vmatpush2.msra.mxu0 0.0
      %1367 = vmatprep.subr.mxu0 0.0
      %1368 = vmatpush2.msra.mxu0 0.0
      %1369 = vmatprep.subr.mxu0 0.0
      %1370 = vmatpush2.msra.mxu0 0.0
      %1371 = vmatprep.subr.mxu0 0.0
      %1372 = vmatpush2.msra.mxu0 0.0
      %1373 = vmatprep.subr.mxu0 0.0
      %1374 = vmatpush2.msra.mxu0 0.0
      %1375 = vmatprep.subr.mxu0 0.0
      %1376 = vmatpush2.msra.mxu0 0.0
      %1377 = vmatprep.subr.mxu0 0.0
      %1378 = vmatpush2.msra.mxu0 0.0
      %1379 = vmatprep.subr.mxu0 0.0
      %1380 = vmatpush2.msra.mxu0 0.0
      %1381 = vmatprep.subr.mxu0 0.0
      %1382 = vmatpush2.msra.mxu0 0.0
      %1383 = vmatprep.subr.mxu0 0.0
      %1384 = vmatpush2.msra.mxu0 0.0
      %1385 = vmatprep.subr.mxu0 0.0
      %1386 = vmatpush2.msra.mxu0 0.0
      %1387 = vmatprep.mubr.f32.mxu0 0.0
      %1388 = vmatmul.mubr.f32.gmra.mxu0 %v1268
      %v1389 = vpop.f32.mrf.mxu0
      %v1390 = vadd.f32 %v1321, %v1389
      %v1391 = vpop.f32.mrf.mxu0
      %1392 = vmatprep.mubr.f32.mxu0 0.0
      %1393 = vmatmul.mubr.f32.gmra.mxu0 %v1269
      %v1394 = vpop.f32.mrf.mxu0
      %v1395 = vadd.f32 %v1321, %v1394
      %v1396 = vpop.f32.mrf.mxu0
      %1397 = vmatprep.mubr.f32.mxu0 0.0
      %1398 = vmatmul.mubr.f32.gmra.mxu0 %v1270
      %v1399 = vpop.f32.mrf.mxu0
      %v1400 = vadd.f32 %v1321, %v1399
      %v1401 = vpop.f32.mrf.mxu0
      %1402 = vmatprep.mubr.f32.mxu0 0.0
      %1403 = vmatmul.mubr.f32.gmra.mxu0 %v1271
      %v1404 = vpop.f32.mrf.mxu0
      %v1405 = vadd.f32 %v1321, %v1404
      %v1406 = vpop.f32.mrf.mxu0
      %1407 = vmatprep.mubr.f32.mxu0 0.0
      %1408 = vmatmul.mubr.f32.gmra.mxu0 %v1272
      %v1409 = vpop.f32.mrf.mxu0
      %v1410 = vadd.f32 %v1321, %v1409
      %v1411 = vpop.f32.mrf.mxu0
      %1412 = vmatprep.mubr.f32.mxu0 0.0
      %1413 = vmatmul.mubr.f32.gmra.mxu0 %v1273
      %v1414 = vpop.f32.mrf.mxu0
      %v1415 = vadd.f32 %v1321, %v1414
      %v1416 = vpop.f32.mrf.mxu0
      %1417 = vmatprep.mubr.f32.mxu0 0.0
      %1418 = vmatmul.mubr.f32.gmra.mxu0 %v1274
      %v1419 = vpop.f32.mrf.mxu0
      %v1420 = vadd.f32 %v1321, %v1419
      %v1421 = vpop.f32.mrf.mxu0
      %1422 = vmatprep.mubr.f32.mxu0 0.0
      %1423 = vmatmul.mubr.f32.gmra.mxu0 %v1275
      %v1424 = vpop.f32.mrf.mxu0
      %v1425 = vadd.f32 %v1321, %v1424
      %v1426 = vpop.f32.mrf.mxu0
      %1427 = vmatprep.mubr.f32.mxu0 0.0
      %1428 = vmatmul.mubr.f32.gmra.mxu0 %v1276
      %v1429 = vpop.f32.mrf.mxu0
      %v1430 = vadd.f32 %v1321, %v1429
      %v1431 = vpop.f32.mrf.mxu0
      %1432 = vmatprep.mubr.f32.mxu0 0.0
      %1433 = vmatmul.mubr.f32.gmra.mxu0 %v1277
      %v1434 = vpop.f32.mrf.mxu0
      %v1435 = vadd.f32 %v1321, %v1434
      %v1436 = vpop.f32.mrf.mxu0
      %1437 = vmatprep.mubr.f32.mxu0 0.0
      %1438 = vmatmul.mubr.f32.gmra.mxu0 %v1278
      %v1439 = vpop.f32.mrf.mxu0
      %v1440 = vadd.f32 %v1321, %v1439
      %v1441 = vpop.f32.mrf.mxu0
      %1442 = vmatprep.mubr.f32.mxu0 0.0
      %1443 = vmatmul.mubr.f32.gmra.mxu0 %v1279
      %v1444 = vpop.f32.mrf.mxu0
      %v1445 = vadd.f32 %v1321, %v1444
      %v1446 = vpop.f32.mrf.mxu0
      %1447 = vmatprep.mubr.f32.mxu0 0.0
      %1448 = vmatmul.mubr.f32.gmra.mxu0 %v1280
      %v1449 = vpop.f32.mrf.mxu0
      %v1450 = vadd.f32 %v1321, %v1449
      %v1451 = vpop.f32.mrf.mxu0
      %1452 = vmatprep.mubr.f32.mxu0 0.0
      %1453 = vmatmul.mubr.f32.gmra.mxu0 %v1281
      %v1454 = vpop.f32.mrf.mxu0
      %v1455 = vadd.f32 %v1321, %v1454
      %v1456 = vpop.f32.mrf.mxu0
      %1457 = vmatprep.mubr.f32.mxu0 0.0
      %1458 = vmatmul.mubr.f32.gmra.mxu0 %v1282
      %v1459 = vpop.f32.mrf.mxu0
      %v1460 = vadd.f32 %v1321, %v1459
      %v1461 = vpop.f32.mrf.mxu0
      %1462 = vmatprep.mubr.f32.mxu0 0.0
      %1463 = vmatmul.mubr.f32.gmra.mxu0 %v1283
      %v1464 = vpop.f32.mrf.mxu0
      %v1465 = vadd.f32 %v1321, %v1464
      %v1466 = vpop.f32.mrf.mxu0
      %1467 = vmatprep.mubr.f32.mxu0 0.0
      %1468 = vmatmul.mubr.f32.gmra.mxu0 %v1284
      %v1469 = vpop.f32.mrf.mxu0
      %v1470 = vadd.f32 %v1321, %v1469
      %v1471 = vpop.f32.mrf.mxu0
      %1472 = vmatprep.mubr.f32.mxu0 0.0
      %1473 = vmatmul.mubr.f32.gmra.mxu0 %v1285
      %v1474 = vpop.f32.mrf.mxu0
      %v1475 = vadd.f32 %v1321, %v1474
      %v1476 = vpop.f32.mrf.mxu0
      %1477 = vmatprep.mubr.f32.mxu0 0.0
      %1478 = vmatmul.mubr.f32.gmra.mxu0 %v1286
      %v1479 = vpop.f32.mrf.mxu0
      %v1480 = vadd.f32 %v1321, %v1479
      %v1481 = vpop.f32.mrf.mxu0
      %1482 = vmatprep.mubr.f32.mxu0 0.0
      %1483 = vmatmul.mubr.f32.gmra.mxu0 %v1287
      %v1484 = vpop.f32.mrf.mxu0
      %v1485 = vadd.f32 %v1321, %v1484
      %v1486 = vpop.f32.mrf.mxu0
      %1487 = vmatprep.mubr.f32.mxu0 0.0
      %1488 = vmatmul.mubr.f32.gmra.mxu0 %v1288
      %v1489 = vpop.f32.mrf.mxu0
      %v1490 = vadd.f32 %v1321, %v1489
      %v1491 = vpop.f32.mrf.mxu0
      %1492 = vmatprep.mubr.f32.mxu0 0.0
      %1493 = vmatmul.mubr.f32.gmra.mxu0 %v1289
      %v1494 = vpop.f32.mrf.mxu0
      %v1495 = vadd.f32 %v1321, %v1494
      %v1496 = vpop.f32.mrf.mxu0
      %1497 = vmatprep.mubr.f32.mxu0 0.0
      %1498 = vmatmul.mubr.f32.gmra.mxu0 %v1290
      %v1499 = vpop.f32.mrf.mxu0
      %v1500 = vadd.f32 %v1321, %v1499
      %v1501 = vpop.f32.mrf.mxu0
      %1502 = vmatprep.mubr.f32.mxu0 0.0
      %1503 = vmatmul.mubr.f32.gmra.mxu0 %v1291
      %v1504 = vpop.f32.mrf.mxu0
      %v1505 = vadd.f32 %v1321, %v1504
      %v1506 = vpop.f32.mrf.mxu0
      %1507 = vmatprep.mubr.f32.mxu0 0.0
      %1508 = vmatmul.mubr.f32.gmra.mxu0 %v1292
      %v1509 = vpop.f32.mrf.mxu0
      %v1510 = vadd.f32 %v1321, %v1509
      %v1511 = vpop.f32.mrf.mxu0
      %1512 = vmatprep.mubr.f32.mxu0 0.0
      %1513 = vmatmul.mubr.f32.gmra.mxu0 %v1293
      %v1514 = vpop.f32.mrf.mxu0
      %v1515 = vadd.f32 %v1321, %v1514
      %v1516 = vpop.f32.mrf.mxu0
      %1517 = vmatprep.mubr.f32.mxu0 0.0
      %1518 = vmatmul.mubr.f32.gmra.mxu0 %v1294
      %v1519 = vpop.f32.mrf.mxu0
      %v1520 = vadd.f32 %v1321, %v1519
      %v1521 = vpop.f32.mrf.mxu0
      %1522 = vmatprep.mubr.f32.mxu0 0.0
      %1523 = vmatmul.mubr.f32.gmra.mxu0 %v1295
      %v1524 = vpop.f32.mrf.mxu0
      %v1525 = vadd.f32 %v1321, %v1524
      %v1526 = vpop.f32.mrf.mxu0
      %1527 = vmatprep.mubr.f32.mxu0 0.0
      %1528 = vmatmul.mubr.f32.gmra.mxu0 %v1296
      %v1529 = vpop.f32.mrf.mxu0
      %v1530 = vadd.f32 %v1321, %v1529
      %v1531 = vpop.f32.mrf.mxu0
      %1532 = vmatprep.mubr.f32.mxu0 0.0
      %1533 = vmatmul.mubr.f32.gmra.mxu0 %v1297
      %v1534 = vpop.f32.mrf.mxu0
      %v1535 = vadd.f32 %v1321, %v1534
      %v1536 = vpop.f32.mrf.mxu0
      %1537 = vmatprep.mubr.f32.mxu0 0.0
      %1538 = vmatmul.mubr.f32.gmra.mxu0 %v1298
      %v1539 = vpop.f32.mrf.mxu0
      %v1540 = vadd.f32 %v1321, %v1539
      %v1541 = vpop.f32.mrf.mxu0
      %1542 = vmatprep.mubr.f32.mxu0 0.0
      %1543 = vmatmul.mubr.f32.gmra.mxu0 %v1299
      %v1544 = vpop.f32.mrf.mxu0
      %v1545 = vadd.f32 %v1321, %v1544
      %v1546 = vpop.f32.mrf.mxu0
      %1547 = vdwg.mxu0
      %v1548 = vmax.f32 %v1390, 0.0
      %v1549 = vmax.f32 %v1395, 0.0
      %v1550 = vmax.f32 %v1400, 0.0
      %v1551 = vmax.f32 %v1405, 0.0
      %v1552 = vmax.f32 %v1410, 0.0
      %v1553 = vmax.f32 %v1415, 0.0
      %v1554 = vmax.f32 %v1420, 0.0
      %v1555 = vmax.f32 %v1425, 0.0
      %v1556 = vmax.f32 %v1430, 0.0
      %v1557 = vmax.f32 %v1435, 0.0
      %v1558 = vmax.f32 %v1440, 0.0
      %v1559 = vmax.f32 %v1445, 0.0
      %v1560 = vmax.f32 %v1450, 0.0
      %v1561 = vmax.f32 %v1455, 0.0
      %v1562 = vmax.f32 %v1460, 0.0
      %v1563 = vmax.f32 %v1465, 0.0
      %v1564 = vmax.f32 %v1470, 0.0
      %v1565 = vmax.f32 %v1475, 0.0
      %v1566 = vmax.f32 %v1480, 0.0
      %v1567 = vmax.f32 %v1485, 0.0
      %v1568 = vmax.f32 %v1490, 0.0
      %v1569 = vmax.f32 %v1495, 0.0
      %v1570 = vmax.f32 %v1500, 0.0
      %v1571 = vmax.f32 %v1505, 0.0
      %v1572 = vmax.f32 %v1510, 0.0
      %v1573 = vmax.f32 %v1515, 0.0
      %v1574 = vmax.f32 %v1520, 0.0
      %v1575 = vmax.f32 %v1525, 0.0
      %v1576 = vmax.f32 %v1530, 0.0
      %v1577 = vmax.f32 %v1535, 0.0
      %v1578 = vmax.f32 %v1540, 0.0
      %v1579 = vmax.f32 %v1545, 0.0
      %v1580 = vld [vmem:[%s5] sm:$0xff]
      %v1581 = vld [vmem:[%s5 + $0x8] sm:$0xff]
      %v1582 = vld [vmem:[%s5 + $0x10] sm:$0xff]
      %v1583 = vld [vmem:[%s5 + $0x18] sm:$0xff]
      %v1584 = vld [vmem:[%s5 + $0x20] sm:$0xff]
      %v1585 = vld [vmem:[%s5 + $0x28] sm:$0xff]
      %v1586 = vld [vmem:[%s5 + $0x30] sm:$0xff]
      %v1587 = vld [vmem:[%s5 + $0x38] sm:$0xff]
      %v1588 = vld [vmem:[%s5 + $0x40] sm:$0xff]
      %v1589 = vld [vmem:[%s5 + $0x48] sm:$0xff]
      %v1590 = vld [vmem:[%s5 + $0x50] sm:$0xff]
      %v1591 = vld [vmem:[%s5 + $0x58] sm:$0xff]
      %v1592 = vld [vmem:[%s5 + $0x60] sm:$0xff]
      %v1593 = vld [vmem:[%s5 + $0x68] sm:$0xff]
      %v1594 = vld [vmem:[%s5 + $0x70] sm:$0xff]
      %v1595 = vld [vmem:[%s5 + $0x78] sm:$0xff]
      %v1596 = vld [vmem:[%s6] sm:$0x1]
      %v1598 = vlaneseq
      %v1599 = vshrl.u32 %v1598, 7
      %v1600 = vsub.s32 0, %v1599
      %v1601 = vrot.slane %v1596, %v1600
      %1603 = vmatprep.subr.mxu0 0.0
      %1604 = vmatpush1.msra.mxu0 %v1595
      %1605 = vmatprep.subr.mxu0 0.0
      %1606 = vmatpush1.msra.mxu0 %v1594
      %1607 = vmatprep.subr.mxu0 0.0
      %1608 = vmatpush1.msra.mxu0 %v1593
      %1609 = vmatprep.subr.mxu0 0.0
      %1610 = vmatpush1.msra.mxu0 %v1592
      %1611 = vmatprep.subr.mxu0 0.0
      %1612 = vmatpush1.msra.mxu0 %v1591
      %1613 = vmatprep.subr.mxu0 0.0
      %1614 = vmatpush1.msra.mxu0 %v1590
      %1615 = vmatprep.subr.mxu0 0.0
      %1616 = vmatpush1.msra.mxu0 %v1589
      %1617 = vmatprep.subr.mxu0 0.0
      %1618 = vmatpush1.msra.mxu0 %v1588
      %1619 = vmatprep.subr.mxu0 0.0
      %1620 = vmatpush1.msra.mxu0 %v1587
      %1621 = vmatprep.subr.mxu0 0.0
      %1622 = vmatpush1.msra.mxu0 %v1586
      %1623 = vmatprep.subr.mxu0 0.0
      %1624 = vmatpush1.msra.mxu0 %v1585
      %1625 = vmatprep.subr.mxu0 0.0
      %1626 = vmatpush1.msra.mxu0 %v1584
      %1627 = vmatprep.subr.mxu0 0.0
      %1628 = vmatpush1.msra.mxu0 %v1583
      %1629 = vmatprep.subr.mxu0 0.0
      %1630 = vmatpush1.msra.mxu0 %v1582
      %1631 = vmatprep.subr.mxu0 0.0
      %1632 = vmatpush1.msra.mxu0 %v1581
      %1633 = vmatprep.subr.mxu0 0.0
      %1634 = vmatpush1.msra.mxu0 %v1580
      %1635 = vmatprep.subr.mxu0 0.0
      %1636 = vmatpush2.msra.mxu0 0.0
      %1637 = vmatprep.subr.mxu0 0.0
      %1638 = vmatpush2.msra.mxu0 0.0
      %1639 = vmatprep.subr.mxu0 0.0
      %1640 = vmatpush2.msra.mxu0 0.0
      %1641 = vmatprep.subr.mxu0 0.0
      %1642 = vmatpush2.msra.mxu0 0.0
      %1643 = vmatprep.subr.mxu0 0.0
      %1644 = vmatpush2.msra.mxu0 0.0
      %1645 = vmatprep.subr.mxu0 0.0
      %1646 = vmatpush2.msra.mxu0 0.0
      %1647 = vmatprep.subr.mxu0 0.0
      %1648 = vmatpush2.msra.mxu0 0.0
      %1649 = vmatprep.subr.mxu0 0.0
      %1650 = vmatpush2.msra.mxu0 0.0
      %1651 = vmatprep.subr.mxu0 0.0
      %1652 = vmatpush2.msra.mxu0 0.0
      %1653 = vmatprep.subr.mxu0 0.0
      %1654 = vmatpush2.msra.mxu0 0.0
      %1655 = vmatprep.subr.mxu0 0.0
      %1656 = vmatpush2.msra.mxu0 0.0
      %1657 = vmatprep.subr.mxu0 0.0
      %1658 = vmatpush2.msra.mxu0 0.0
      %1659 = vmatprep.subr.mxu0 0.0
      %1660 = vmatpush2.msra.mxu0 0.0
      %1661 = vmatprep.subr.mxu0 0.0
      %1662 = vmatpush2.msra.mxu0 0.0
      %1663 = vmatprep.subr.mxu0 0.0
      %1664 = vmatpush2.msra.mxu0 0.0
      %1665 = vmatprep.subr.mxu0 0.0
      %1666 = vmatpush2.msra.mxu0 0.0
      %1667 = vmatprep.mubr.f32.mxu0 0.0
      %1668 = vmatmul.mubr.f32.gmra.mxu0 %v1548
      %v1669 = vpop.f32.mrf.mxu0
      %v1670 = vadd.f32 %v1601, %v1669
      %v1671 = vpop.f32.mrf.mxu0
      %1672 = vmatprep.mubr.f32.mxu0 0.0
      %1673 = vmatmul.mubr.f32.gmra.mxu0 %v1549
      %v1674 = vpop.f32.mrf.mxu0
      %v1675 = vadd.f32 %v1601, %v1674
      %v1676 = vpop.f32.mrf.mxu0
      %1677 = vmatprep.mubr.f32.mxu0 0.0
      %1678 = vmatmul.mubr.f32.gmra.mxu0 %v1550
      %v1679 = vpop.f32.mrf.mxu0
      %v1680 = vadd.f32 %v1601, %v1679
      %v1681 = vpop.f32.mrf.mxu0
      %1682 = vmatprep.mubr.f32.mxu0 0.0
      %1683 = vmatmul.mubr.f32.gmra.mxu0 %v1551
      %v1684 = vpop.f32.mrf.mxu0
      %v1685 = vadd.f32 %v1601, %v1684
      %v1686 = vpop.f32.mrf.mxu0
      %1687 = vmatprep.mubr.f32.mxu0 0.0
      %1688 = vmatmul.mubr.f32.gmra.mxu0 %v1552
      %v1689 = vpop.f32.mrf.mxu0
      %v1690 = vadd.f32 %v1601, %v1689
      %v1691 = vpop.f32.mrf.mxu0
      %1692 = vmatprep.mubr.f32.mxu0 0.0
      %1693 = vmatmul.mubr.f32.gmra.mxu0 %v1553
      %v1694 = vpop.f32.mrf.mxu0
      %v1695 = vadd.f32 %v1601, %v1694
      %v1696 = vpop.f32.mrf.mxu0
      %1697 = vmatprep.mubr.f32.mxu0 0.0
      %1698 = vmatmul.mubr.f32.gmra.mxu0 %v1554
      %v1699 = vpop.f32.mrf.mxu0
      %v1700 = vadd.f32 %v1601, %v1699
      %v1701 = vpop.f32.mrf.mxu0
      %1702 = vmatprep.mubr.f32.mxu0 0.0
      %1703 = vmatmul.mubr.f32.gmra.mxu0 %v1555
      %v1704 = vpop.f32.mrf.mxu0
      %v1705 = vadd.f32 %v1601, %v1704
      %v1706 = vpop.f32.mrf.mxu0
      %1707 = vmatprep.mubr.f32.mxu0 0.0
      %1708 = vmatmul.mubr.f32.gmra.mxu0 %v1556
      %v1709 = vpop.f32.mrf.mxu0
      %v1710 = vadd.f32 %v1601, %v1709
      %v1711 = vpop.f32.mrf.mxu0
      %1712 = vmatprep.mubr.f32.mxu0 0.0
      %1713 = vmatmul.mubr.f32.gmra.mxu0 %v1557
      %v1714 = vpop.f32.mrf.mxu0
      %v1715 = vadd.f32 %v1601, %v1714
      %v1716 = vpop.f32.mrf.mxu0
      %1717 = vmatprep.mubr.f32.mxu0 0.0
      %1718 = vmatmul.mubr.f32.gmra.mxu0 %v1558
      %v1719 = vpop.f32.mrf.mxu0
      %v1720 = vadd.f32 %v1601, %v1719
      %v1721 = vpop.f32.mrf.mxu0
      %1722 = vmatprep.mubr.f32.mxu0 0.0
      %1723 = vmatmul.mubr.f32.gmra.mxu0 %v1559
      %v1724 = vpop.f32.mrf.mxu0
      %v1725 = vadd.f32 %v1601, %v1724
      %v1726 = vpop.f32.mrf.mxu0
      %1727 = vmatprep.mubr.f32.mxu0 0.0
      %1728 = vmatmul.mubr.f32.gmra.mxu0 %v1560
      %v1729 = vpop.f32.mrf.mxu0
      %v1730 = vadd.f32 %v1601, %v1729
      %v1731 = vpop.f32.mrf.mxu0
      %1732 = vmatprep.mubr.f32.mxu0 0.0
      %1733 = vmatmul.mubr.f32.gmra.mxu0 %v1561
      %v1734 = vpop.f32.mrf.mxu0
      %v1735 = vadd.f32 %v1601, %v1734
      %v1736 = vpop.f32.mrf.mxu0
      %1737 = vmatprep.mubr.f32.mxu0 0.0
      %1738 = vmatmul.mubr.f32.gmra.mxu0 %v1562
      %v1739 = vpop.f32.mrf.mxu0
      %v1740 = vadd.f32 %v1601, %v1739
      %v1741 = vpop.f32.mrf.mxu0
      %1742 = vmatprep.mubr.f32.mxu0 0.0
      %1743 = vmatmul.mubr.f32.gmra.mxu0 %v1563
      %v1744 = vpop.f32.mrf.mxu0
      %v1745 = vadd.f32 %v1601, %v1744
      %v1746 = vpop.f32.mrf.mxu0
      %1747 = vmatprep.mubr.f32.mxu0 0.0
      %1748 = vmatmul.mubr.f32.gmra.mxu0 %v1564
      %v1749 = vpop.f32.mrf.mxu0
      %v1750 = vadd.f32 %v1601, %v1749
      %v1751 = vpop.f32.mrf.mxu0
      %1752 = vmatprep.mubr.f32.mxu0 0.0
      %1753 = vmatmul.mubr.f32.gmra.mxu0 %v1565
      %v1754 = vpop.f32.mrf.mxu0
      %v1755 = vadd.f32 %v1601, %v1754
      %v1756 = vpop.f32.mrf.mxu0
      %1757 = vmatprep.mubr.f32.mxu0 0.0
      %1758 = vmatmul.mubr.f32.gmra.mxu0 %v1566
      %v1759 = vpop.f32.mrf.mxu0
      %v1760 = vadd.f32 %v1601, %v1759
      %v1761 = vpop.f32.mrf.mxu0
      %1762 = vmatprep.mubr.f32.mxu0 0.0
      %1763 = vmatmul.mubr.f32.gmra.mxu0 %v1567
      %v1764 = vpop.f32.mrf.mxu0
      %v1765 = vadd.f32 %v1601, %v1764
      %v1766 = vpop.f32.mrf.mxu0
      %1767 = vmatprep.mubr.f32.mxu0 0.0
      %1768 = vmatmul.mubr.f32.gmra.mxu0 %v1568
      %v1769 = vpop.f32.mrf.mxu0
      %v1770 = vadd.f32 %v1601, %v1769
      %v1771 = vpop.f32.mrf.mxu0
      %1772 = vmatprep.mubr.f32.mxu0 0.0
      %1773 = vmatmul.mubr.f32.gmra.mxu0 %v1569
      %v1774 = vpop.f32.mrf.mxu0
      %v1775 = vadd.f32 %v1601, %v1774
      %v1776 = vpop.f32.mrf.mxu0
      %1777 = vmatprep.mubr.f32.mxu0 0.0
      %1778 = vmatmul.mubr.f32.gmra.mxu0 %v1570
      %v1779 = vpop.f32.mrf.mxu0
      %v1780 = vadd.f32 %v1601, %v1779
      %v1781 = vpop.f32.mrf.mxu0
      %1782 = vmatprep.mubr.f32.mxu0 0.0
      %1783 = vmatmul.mubr.f32.gmra.mxu0 %v1571
      %v1784 = vpop.f32.mrf.mxu0
      %v1785 = vadd.f32 %v1601, %v1784
      %v1786 = vpop.f32.mrf.mxu0
      %1787 = vmatprep.mubr.f32.mxu0 0.0
      %1788 = vmatmul.mubr.f32.gmra.mxu0 %v1572
      %v1789 = vpop.f32.mrf.mxu0
      %v1790 = vadd.f32 %v1601, %v1789
      %v1791 = vpop.f32.mrf.mxu0
      %1792 = vmatprep.mubr.f32.mxu0 0.0
      %1793 = vmatmul.mubr.f32.gmra.mxu0 %v1573
      %v1794 = vpop.f32.mrf.mxu0
      %v1795 = vadd.f32 %v1601, %v1794
      %v1796 = vpop.f32.mrf.mxu0
      %1797 = vmatprep.mubr.f32.mxu0 0.0
      %1798 = vmatmul.mubr.f32.gmra.mxu0 %v1574
      %v1799 = vpop.f32.mrf.mxu0
      %v1800 = vadd.f32 %v1601, %v1799
      %v1801 = vpop.f32.mrf.mxu0
      %1802 = vmatprep.mubr.f32.mxu0 0.0
      %1803 = vmatmul.mubr.f32.gmra.mxu0 %v1575
      %v1804 = vpop.f32.mrf.mxu0
      %v1805 = vadd.f32 %v1601, %v1804
      %v1806 = vpop.f32.mrf.mxu0
      %1807 = vmatprep.mubr.f32.mxu0 0.0
      %1808 = vmatmul.mubr.f32.gmra.mxu0 %v1576
      %v1809 = vpop.f32.mrf.mxu0
      %v1810 = vadd.f32 %v1601, %v1809
      %v1811 = vpop.f32.mrf.mxu0
      %1812 = vmatprep.mubr.f32.mxu0 0.0
      %1813 = vmatmul.mubr.f32.gmra.mxu0 %v1577
      %v1814 = vpop.f32.mrf.mxu0
      %v1815 = vadd.f32 %v1601, %v1814
      %v1816 = vpop.f32.mrf.mxu0
      %1817 = vmatprep.mubr.f32.mxu0 0.0
      %1818 = vmatmul.mubr.f32.gmra.mxu0 %v1578
      %v1819 = vpop.f32.mrf.mxu0
      %v1820 = vadd.f32 %v1601, %v1819
      %v1821 = vpop.f32.mrf.mxu0
      %1822 = vmatprep.mubr.f32.mxu0 0.0
      %1823 = vmatmul.mubr.f32.gmra.mxu0 %v1579
      %v1824 = vpop.f32.mrf.mxu0
      %v1825 = vadd.f32 %v1601, %v1824
      %v1826 = vpop.f32.mrf.mxu0
      %1827 = vdwg.mxu0
      %v1828 = vtanh.pop %v1670
      %v1829 = vtanh.pop %v1675
      %v1830 = vtanh.pop %v1680
      %v1831 = vtanh.pop %v1685
      %v1832 = vtanh.pop %v1690
      %v1833 = vtanh.pop %v1695
      %v1834 = vtanh.pop %v1700
      %v1835 = vtanh.pop %v1705
      %v1836 = vtanh.pop %v1710
      %v1837 = vtanh.pop %v1715
      %v1838 = vtanh.pop %v1720
      %v1839 = vtanh.pop %v1725
      %v1840 = vtanh.pop %v1730
      %v1841 = vtanh.pop %v1735
      %v1842 = vtanh.pop %v1740
      %v1843 = vtanh.pop %v1745
      %v1844 = vtanh.pop %v1750
      %v1845 = vtanh.pop %v1755
      %v1846 = vtanh.pop %v1760
      %v1847 = vtanh.pop %v1765
      %v1848 = vtanh.pop %v1770
      %v1849 = vtanh.pop %v1775
      %v1850 = vtanh.pop %v1780
      %v1851 = vtanh.pop %v1785
      %v1852 = vtanh.pop %v1790
      %v1853 = vtanh.pop %v1795
      %v1854 = vtanh.pop %v1800
      %v1855 = vtanh.pop %v1805
      %v1856 = vtanh.pop %v1810
      %v1857 = vtanh.pop %v1815
      %v1858 = vtanh.pop %v1820
      %v1859 = vtanh.pop %v1825
      %1860 = vst [vmem:[%s280] sm:$0xff] %v1828
      %1861 = vst [vmem:[%s280 + $0x8] sm:$0xff] %v1829
      %1862 = vst [vmem:[%s280 + $0x10] sm:$0xff] %v1830
      %1863 = vst [vmem:[%s280 + $0x18] sm:$0xff] %v1831
      %1864 = vst [vmem:[%s280 + $0x20] sm:$0xff] %v1832
      %1865 = vst [vmem:[%s280 + $0x28] sm:$0xff] %v1833
      %1866 = vst [vmem:[%s280 + $0x30] sm:$0xff] %v1834
      %1867 = vst [vmem:[%s280 + $0x38] sm:$0xff] %v1835
      %1868 = vst [vmem:[%s280 + $0x40] sm:$0xff] %v1836
      %1869 = vst [vmem:[%s280 + $0x48] sm:$0xff] %v1837
      %1870 = vst [vmem:[%s280 + $0x50] sm:$0xff] %v1838
      %1871 = vst [vmem:[%s280 + $0x58] sm:$0xff] %v1839
      %1872 = vst [vmem:[%s280 + $0x60] sm:$0xff] %v1840
      %1873 = vst [vmem:[%s280 + $0x68] sm:$0xff] %v1841
      %1874 = vst [vmem:[%s280 + $0x70] sm:$0xff] %v1842
      %1875 = vst [vmem:[%s280 + $0x78] sm:$0xff] %v1843
      %1876 = vst [vmem:[%s280 + $0x80] sm:$0xff] %v1844
      %1877 = vst [vmem:[%s280 + $0x88] sm:$0xff] %v1845
      %1878 = vst [vmem:[%s280 + $0x90] sm:$0xff] %v1846
      %1879 = vst [vmem:[%s280 + $0x98] sm:$0xff] %v1847
      %1880 = vst [vmem:[%s280 + $0xa0] sm:$0xff] %v1848
      %1881 = vst [vmem:[%s280 + $0xa8] sm:$0xff] %v1849
      %1882 = vst [vmem:[%s280 + $0xb0] sm:$0xff] %v1850
      %1883 = vst [vmem:[%s280 + $0xb8] sm:$0xff] %v1851
      %1884 = vst [vmem:[%s280 + $0xc0] sm:$0xff] %v1852
      %1885 = vst [vmem:[%s280 + $0xc8] sm:$0xff] %v1853
      %1886 = vst [vmem:[%s280 + $0xd0] sm:$0xff] %v1854
      %1887 = vst [vmem:[%s280 + $0xd8] sm:$0xff] %v1855
      %1888 = vst [vmem:[%s280 + $0xe0] sm:$0xff] %v1856
      %1889 = vst [vmem:[%s280 + $0xe8] sm:$0xff] %v1857
      %1890 = vst [vmem:[%s280 + $0xf0] sm:$0xff] %v1858
      %1891 = vst [vmem:[%s280 + $0xf8] sm:$0xff] %v1859
      %s1892 = smul.u32 32, %s18
      %p1893 = scmp.lt.s32.totalorder %s1892, 63
      %s1894 = scalar_select %p1893, %s1892, 63
      %s1895 = smul.addr %s1894, 8
      %s1896 = scalar_lea.vmem %s7, %s1895
      // Predicated region
      $region49: #{bc_actor_forward.1} parent=47 // pred_check
        %p1897 = pneg %p188
      $region50: #{bc_actor_forward.1} parent=47 // pred_check_branch
        %1899 = sbr.rel (%p1897) target = $region52
      $region51: #{bc_actor_forward.1} parent=47 // pred_region
        %s1900 = smul.u32 32, %s18
      $region52: #{bc_actor_forward.1} parent=47 // pred_fallthru
        _
    $region48: #{bc_actor_forward.1} parent=5 // pred_fallthru
      _
    %p1901 = scmp.le.s32.totalorder 2, %s13
    // Predicated region
    $region53: #{bc_actor_forward.1} parent=5 // pred_check
      %p1902 = pneg %p1901
    $region54: #{bc_actor_forward.1} parent=5 // pred_check_branch
      %1904 = sbr.rel (%p1902) target = $region56
    $region55: #{bc_actor_forward.1} parent=5 // pred_region
      %s1905 = ssub.s32 %s13, 2
      // Predicated region
      $region57: #{bc_actor_forward.1} parent=55 // pred_check
        %p1906 = pneg %p194
      $region58: #{bc_actor_forward.1} parent=55 // pred_check_branch
        %1908 = sbr.rel (%p1906) target = $region60
      $region59: #{bc_actor_forward.1} parent=55 // pred_region
        %s1909 = smul.u32 32, %s19
        %p1910 = scmp.lt.s32.totalorder %s1909, 63
        %s1911 = scalar_select %p1910, %s1909, 63
        %s1912 = smul.addr %s1911, 8
        %s1913 = scalar_lea.vmem %s7, %s1912
      $region60: #{bc_actor_forward.1} parent=55 // pred_fallthru
        _
    $region56: #{bc_actor_forward.1} parent=5 // pred_fallthru
      _
  $region6: #{bc_actor_forward.1} parent=0 // loop_footer
    %s17 = sadd.s32 1, %s13
  $region7: #{bc_actor_forward.1} parent=0 // loop_footer_branch
    %12 = sbr.rel target = $region3
  $region8: #{bc_actor_forward.1} parent=0 // loop_exit
    _

</llo_original>
